<compile_context>
chip_gen: v7x
topology: tpu7x:2x2x1
jax: 0.10.0
libtpu: 0.0.40
codegen_flags: <defaults>
</compile_context>

<pallas_src>
import functools

import jax
import jax.numpy as jnp
from jax.experimental import pallas as pl
from jax.experimental.pallas import tpu as pltpu


def _layernorm(x, g, b, eps=1e-5):
    mu = jnp.mean(x, axis=-1, keepdims=True)
    var = jnp.mean((x - mu) ** 2, axis=-1, keepdims=True)
    return (x - mu) * jax.lax.rsqrt(var + eps) * g + b


def _gelu_exact(x):
    # nn.GELU default: exact erf formulation (f32 on the VPU/EUP).
    return 0.5 * x * (1.0 + jax.lax.erf(x * (2.0 ** -0.5)))


def block_kernel(num_heads, n_valid,
                 x_ref,
                 ln1g_ref, ln1b_ref,
                 wq_ref, wk_ref, wv_ref, wp_ref, bp_ref,
                 ln2g_ref, ln2b_ref,
                 w1_ref, b1_ref, w2_ref, b2_ref,
                 o_ref,
                 q_scr, k_scr, v_scr, oh_scr):
    qt = pl.program_id(1)
    nq, tq, C = q_scr.shape
    n_pad = x_ref.shape[1]
    hd = C // num_heads
    scale = float(hd) ** -0.5
    bf = jnp.bfloat16

    # ---- LN1 + Q/K/V for the full sequence: once per batch element, cached
    # ---- in VMEM scratch (persists across the token-tile grid axis).
    @pl.when(qt == 0)
    def _():
        xn = _layernorm(x_ref[0], ln1g_ref[...], ln1b_ref[...]).astype(bf)
        qf = jnp.dot(xn, wq_ref[...], preferred_element_type=jnp.float32) * scale
        for t in range(nq):                                  # static slab split
            q_scr[t] = qf[t * tq:(t + 1) * tq, :].astype(bf)
        k_scr[...] = jnp.dot(xn, wk_ref[...],
                             preferred_element_type=jnp.float32).astype(bf)
        v_scr[...] = jnp.dot(xn, wv_ref[...],
                             preferred_element_type=jnp.float32).astype(bf)

    # ---------------- Attention branch (this q tile) ----------------
    tok0 = pl.multiple_of(qt * tq, tq)
    x_q = x_ref[0, pl.ds(tok0, tq), :]          # raw f32 tile for the residual
    q = q_scr[qt]                               # (tq, C) bf16, pre-scaled
    k_all = k_scr[...]                          # (n_pad, C) bf16
    v_all = v_scr[...]                          # (n_pad, C) bf16

    if n_valid < n_pad:                         # static: mask padded key cols
        col = jax.lax.broadcasted_iota(jnp.int32, (tq, n_pad), 1)
        key_mask = col < n_valid
    else:
        key_mask = None

    dn = (((1,), (1,)), ((), ()))               # contract last dims: no kh.T
    # TODO(synk): lax.fori_loop + pl.ds head slicing for very large head counts.
    # TODO(synk): bf16 exp on v6e/v7x (keep f32 row-sum/reciprocal) if the
    #             accuracy budget allows.
    for h in range(num_heads):
        lo, hi = h * hd, (h + 1) * hd
        s = jax.lax.dot_general(q[:, lo:hi], k_all[:, lo:hi], dn,
                                preferred_element_type=jnp.float32)  # (tq,n_pad)
        if key_mask is not None:
            s = jnp.where(key_mask, s, -1e30)
        s = s - jnp.max(s, axis=-1, keepdims=True)
        p = jnp.exp(s)                                               # f32
        p = p * pl.reciprocal(jnp.sum(p, axis=-1, keepdims=True), approx=True)
        oh_scr[:, lo:hi] = jnp.dot(p.astype(bf), v_all[:, lo:hi],
                                   preferred_element_type=jnp.float32).astype(bf)

    # Single full-depth output projection (C-deep) instead of per-head matmuls.
    attn_out = jnp.dot(oh_scr[...], wp_ref[...],
                       preferred_element_type=jnp.float32) + bp_ref[...]
    x1 = x_q + attn_out                                      # residual 1

    # ---------------- MLP branch ----------------
    xn2 = _layernorm(x1, ln2g_ref[...], ln2b_ref[...])
    h1 = jnp.dot(xn2.astype(bf), w1_ref[...],
                 preferred_element_type=jnp.float32) + b1_ref[...]
    h1 = _gelu_exact(h1)
    h2 = jnp.dot(h1.astype(bf), w2_ref[...],
                 preferred_element_type=jnp.float32) + b2_ref[...]
    o_ref[0] = (x1 + h2).astype(o_ref.dtype)                 # residual 2


@functools.lru_cache(maxsize=None)
def _supports_single_buffering():
    """Build-time capability probe: does pipeline_mode=pl.Buffered(1) compile?"""
    if not hasattr(pl, "Buffered"):
        return False
    try:
        spec = pl.BlockSpec((8, 128), lambda i: (0, 0),
                            pipeline_mode=pl.Buffered(1))

        def _probe(a_ref, o_ref):
            o_ref[...] = a_ref[...]

        fn = pl.pallas_call(
            _probe,
            out_shape=jax.ShapeDtypeStruct((8, 128), jnp.float32),
            grid_spec=pltpu.PrefetchScalarGridSpec(
                num_scalar_prefetch=0, grid=(1,),
                in_specs=[spec],
                out_specs=pl.BlockSpec((8, 128), lambda i: (0, 0))),
        )
        jax.jit(fn).lower(jnp.zeros((8, 128), jnp.float32)).compile()
        return True
    except Exception:
        return False


def _round_up(a, m):
    return -(-a // m) * m


def vit_block(x, params, num_heads, tq=None):
    B, N, C = x.shape

    # Generation-aware VMEM budget: v5e/v6e have 128 MiB physical, v7x 64 MiB.
    try:
        vmem_cap = int(pltpu.get_tpu_info().vmem_capacity_bytes)
    except Exception:
        vmem_cap = 64 * 1024 * 1024
    vmem_limit = vmem_cap * 7 // 8          # headroom for Mosaic internal scratch
    big_vmem = vmem_cap >= 96 * 1024 * 1024

    if tq is None:
        tq = 256 if big_vmem else 128       # bigger tiles on 128 MiB parts

    # Lane/sublane friendly padding instead of a ragged (tq = N) fallback.
    if N >= tq:
        n_pad = _round_up(N, tq)
    else:
        n_pad = _round_up(N, 8)
        tq = n_pad
    nq = n_pad // tq

    x_in = x if n_pad == N else jnp.pad(x, ((0, 0), (0, n_pad - N), (0, 0)))

    bf = jnp.bfloat16
    # Weights stored bf16 (half the DMA/VMEM); LN params & biases stay f32.
    # TODO(synk): fp8 MLP weights on v7x for further VMEM/DMA savings.
    param_list = [
        params["ln1_g"], params["ln1_b"],
        params["wq"].astype(bf), params["wk"].astype(bf), params["wv"].astype(bf),
        params["wp"].astype(bf), params["bp"],
        params["ln2_g"], params["ln2_b"],
        params["w1"].astype(bf), params["b1"],
        params["w2"].astype(bf), params["b2"],
    ]

    single = pl.Buffered(1) if _supports_single_buffering() else None

    def _spec(shape, index_map, mode):
        if mode is None:
            return pl.BlockSpec(shape, index_map)
        return pl.BlockSpec(shape, index_map, pipeline_mode=mode)

    # Single full-sequence x stream; q tiles + residuals are sliced from it
    # in-kernel (no duplicate x_q stream).  Its block only changes with b, so
    # single-buffer it on small-VMEM chips (v7x); keep double buffering where
    # VMEM is plentiful to overlap the per-batch fetch.
    x_mode = single if not big_vmem else None
    in_specs = [_spec((1, n_pad, C), lambda b, t: (b, 0, 0), x_mode)]
    # Grid-invariant weights: single buffering is free VMEM back.
    for p in param_list:
        in_specs.append(_spec(p.shape, lambda b, t, nd=p.ndim: (0,) * nd, single))

    kernel = functools.partial(block_kernel, num_heads, N)

    out = pl.pallas_call(
        kernel,
        out_shape=jax.ShapeDtypeStruct((B, n_pad, C), x.dtype),
        grid_spec=pltpu.PrefetchScalarGridSpec(
            num_scalar_prefetch=0,
            grid=(B, nq),
            in_specs=in_specs,
            out_specs=pl.BlockSpec((1, tq, C), lambda b, t: (b, t, 0)),
            scratch_shapes=[
                pltpu.VMEM((nq, tq, C), bf),   # Q cache (pre-scaled)
                pltpu.VMEM((n_pad, C), bf),    # K cache
                pltpu.VMEM((n_pad, C), bf),    # V cache
                pltpu.VMEM((tq, C), bf),       # per-head attn-output staging
            ],
        ),
        # NOTE(v7x): the "parallel" batch axis feeds both TensorCores — prefer
        # B >= 2 (ideally even) so neither core idles.
        compiler_params=pltpu.CompilerParams(
            dimension_semantics=("parallel", "arbitrary"),
            vmem_limit_bytes=vmem_limit),
    )(x_in, *param_list)

    return out if n_pad == N else out[:, :N, :]


def vit_block_ref(x, params, num_heads):
    """Pure-JAX f32 reference for correctness checking."""
    B, N, C = x.shape
    hd = C // num_heads
    scale = float(hd) ** -0.5

    def ln(z, g, b):
        mu = jnp.mean(z, -1, keepdims=True)
        var = jnp.mean((z - mu) ** 2, -1, keepdims=True)
        return (z - mu) / jnp.sqrt(var + 1e-5) * g[0] + b[0]

    xn = ln(x, params["ln1_g"], params["ln1_b"])
    q = xn @ params["wq"]
    k = xn @ params["wk"]
    v = xn @ params["wv"]
    q = q.reshape(B, N, num_heads, hd).transpose(0, 2, 1, 3)
    k = k.reshape(B, N, num_heads, hd).transpose(0, 2, 1, 3)
    v = v.reshape(B, N, num_heads, hd).transpose(0, 2, 1, 3)
    a = jax.nn.softmax((q * scale) @ k.transpose(0, 1, 3, 2), axis=-1)
    o = (a @ v).transpose(0, 2, 1, 3).reshape(B, N, C)
    o = o @ params["wp"] + params["bp"][0]
    x1 = x + o
    xn2 = ln(x1, params["ln2_g"], params["ln2_b"])
    h1 = xn2 @ params["w1"] + params["b1"][0]
    h1 = 0.5 * h1 * (1.0 + jax.lax.erf(h1 / jnp.sqrt(2.0)))
    h2 = h1 @ params["w2"] + params["b2"][0]
    return x1 + h2


if __name__ == "__main__":
    num_heads = 4
    C = 32
    hidden = int(C * 4.0)

    key = jax.random.PRNGKey(0)
    keys = jax.random.split(key, 8)
    params = {
        "ln1_g": jnp.ones((1, C), jnp.float32),
        "ln1_b": jnp.zeros((1, C), jnp.float32),
        "wq": 0.05 * jax.random.normal(keys[0], (C, C), jnp.float32),
        "wk": 0.05 * jax.random.normal(keys[1], (C, C), jnp.float32),
        "wv": 0.05 * jax.random.normal(keys[2], (C, C), jnp.float32),
        "wp": 0.05 * jax.random.normal(keys[3], (C, C), jnp.float32),
        "bp": 0.01 * jax.random.normal(keys[4], (1, C), jnp.float32),
        "ln2_g": jnp.ones((1, C), jnp.float32),
        "ln2_b": jnp.zeros((1, C), jnp.float32),
        "w1": 0.05 * jax.random.normal(keys[5], (C, hidden), jnp.float32),
        "b1": 0.01 * jax.random.normal(keys[6], (1, hidden), jnp.float32),
        "w2": 0.05 * jax.random.normal(keys[7], (hidden, C), jnp.float32),
        "b2": jnp.zeros((1, C), jnp.float32),
    }

    # Case 1: aligned sequence, two query tiles (exercises the persistent
    # Q/K/V scratch + per-tile slicing path).
    x1 = jax.random.normal(jax.random.PRNGKey(42), (2, 16, C), jnp.float32)
    out1 = jax.block_until_ready(vit_block(x1, params, num_heads, tq=8))
    ref1 = vit_block_ref(x1, params, num_heads)
    assert out1.shape == x1.shape
    err1 = float(jnp.max(jnp.abs(out1 - ref1)))
    assert jnp.allclose(out1, ref1, rtol=5e-2, atol=2e-2), err1

    # Case 2: ragged sequence -> host-side pad + in-kernel padded-key mask.
    x2 = jax.random.normal(jax.random.PRNGKey(7), (2, 13, C), jnp.float32)
    out2 = jax.block_until_ready(vit_block(x2, params, num_heads))
    ref2 = vit_block_ref(x2, params, num_heads)
    assert out2.shape == x2.shape
    err2 = float(jnp.max(jnp.abs(out2 - ref2)))
    assert jnp.allclose(out2, ref2, rtol=5e-2, atol=2e-2), err2

    print("KERNEL_OK")
</pallas_src>

<mosaic_0001>
module attributes {stable_mosaic.version = 11 : i64} {
  func.func @block_kernel(%arg0: i32, %arg1: i32, %arg2: memref<1x16x32xf32, #tpu.memory_space<vmem>>, %arg3: memref<1x32xf32, #tpu.memory_space<vmem>>, %arg4: memref<1x32xf32, #tpu.memory_space<vmem>>, %arg5: memref<32x32xbf16, #tpu.memory_space<vmem>>, %arg6: memref<32x32xbf16, #tpu.memory_space<vmem>>, %arg7: memref<32x32xbf16, #tpu.memory_space<vmem>>, %arg8: memref<32x32xbf16, #tpu.memory_space<vmem>>, %arg9: memref<1x32xf32, #tpu.memory_space<vmem>>, %arg10: memref<1x32xf32, #tpu.memory_space<vmem>>, %arg11: memref<1x32xf32, #tpu.memory_space<vmem>>, %arg12: memref<32x128xbf16, #tpu.memory_space<vmem>>, %arg13: memref<1x128xf32, #tpu.memory_space<vmem>>, %arg14: memref<128x32xbf16, #tpu.memory_space<vmem>>, %arg15: memref<1x32xf32, #tpu.memory_space<vmem>>, %arg16: memref<1x8x32xf32, #tpu.memory_space<vmem>>, %arg17: memref<2x8x32xbf16, #tpu.memory_space<vmem>>, %arg18: memref<16x32xbf16, #tpu.memory_space<vmem>>, %arg19: memref<16x32xbf16, #tpu.memory_space<vmem>>, %arg20: memref<8x32xbf16, #tpu.memory_space<vmem>>) attributes {dimension_semantics = [#tpu.dimension_semantics<parallel>, #tpu.dimension_semantics<arbitrary>], iteration_bounds = array<i64: 2, 2>, scalar_prefetch = 0 : i64, scratch_operands = 4 : i64, tpu.core_type = #tpu.core_type<tc>, window_params = [{transform_indices = @transform_0, window_bounds = array<i64: 1, 16, 32>}, {pipeline_mode = #tpu.pipeline_mode<synchronous>, transform_indices = @transform_1, window_bounds = array<i64: 1, 32>}, {pipeline_mode = #tpu.pipeline_mode<synchronous>, transform_indices = @transform_2, window_bounds = array<i64: 1, 32>}, {pipeline_mode = #tpu.pipeline_mode<synchronous>, transform_indices = @transform_3, window_bounds = array<i64: 32, 32>}, {pipeline_mode = #tpu.pipeline_mode<synchronous>, transform_indices = @transform_4, window_bounds = array<i64: 32, 32>}, {pipeline_mode = #tpu.pipeline_mode<synchronous>, transform_indices = @transform_5, window_bounds = array<i64: 32, 32>}, {pipeline_mode = #tpu.pipeline_mode<synchronous>, transform_indices = @transform_6, window_bounds = array<i64: 32, 32>}, {pipeline_mode = #tpu.pipeline_mode<synchronous>, transform_indices = @transform_7, window_bounds = array<i64: 1, 32>}, {pipeline_mode = #tpu.pipeline_mode<synchronous>, transform_indices = @transform_8, window_bounds = array<i64: 1, 32>}, {pipeline_mode = #tpu.pipeline_mode<synchronous>, transform_indices = @transform_9, window_bounds = array<i64: 1, 32>}, {pipeline_mode = #tpu.pipeline_mode<synchronous>, transform_indices = @transform_10, window_bounds = array<i64: 32, 128>}, {pipeline_mode = #tpu.pipeline_mode<synchronous>, transform_indices = @transform_11, window_bounds = array<i64: 1, 128>}, {pipeline_mode = #tpu.pipeline_mode<synchronous>, transform_indices = @transform_12, window_bounds = array<i64: 128, 32>}, {pipeline_mode = #tpu.pipeline_mode<synchronous>, transform_indices = @transform_13, window_bounds = array<i64: 1, 32>}, {transform_indices = @transform_14, window_bounds = array<i64: 1, 8, 32>}]} {
    %c0_i32 = arith.constant 0 : i32
    %0 = arith.cmpi eq, %arg1, %c0_i32 : i32
    %1 = arith.extui %0 : i1 to i32
    %c0_i32_0 = arith.constant 0 : i32
    %2 = arith.cmpi ne, %1, %c0_i32_0 : i32
    scf.if %2 {
      %c0_60 = arith.constant 0 : index
      %c0_61 = arith.constant 0 : index
      %c0_62 = arith.constant 0 : index
      %140 = vector.load %arg2[%c0_60, %c0_61, %c0_62] : memref<1x16x32xf32, #tpu.memory_space<vmem>>, vector<1x16x32xf32>
      %141 = vector.shape_cast %140 : vector<1x16x32xf32> to vector<16x32xf32>
      %c0_63 = arith.constant 0 : index
      %c0_64 = arith.constant 0 : index
      %142 = vector.load %arg3[%c0_63, %c0_64] : memref<1x32xf32, #tpu.memory_space<vmem>>, vector<1x32xf32>
      %c0_65 = arith.constant 0 : index
      %c0_66 = arith.constant 0 : index
      %143 = vector.load %arg4[%c0_65, %c0_66] : memref<1x32xf32, #tpu.memory_space<vmem>>, vector<1x32xf32>
      %cst_67 = arith.constant dense<0.000000e+00> : vector<16xf32>
      %144 = vector.multi_reduction <add>, %141, %cst_67 [1] : vector<16x32xf32> to vector<16xf32>
      %145 = vector.shape_cast %144 : vector<16xf32> to vector<16x1xf32>
      %cst_68 = arith.constant 3.200000e+01 : f32
      %146 = vector.broadcast %cst_68 : f32 to vector<16x1xf32>
      %147 = arith.divf %145, %146 : vector<16x1xf32>
      %148 = vector.broadcast %147 : vector<16x1xf32> to vector<16x32xf32>
      %149 = arith.subf %141, %148 : vector<16x32xf32>
      %150 = arith.mulf %149, %149 : vector<16x32xf32>
      %cst_69 = arith.constant dense<0.000000e+00> : vector<16xf32>
      %151 = vector.multi_reduction <add>, %150, %cst_69 [1] : vector<16x32xf32> to vector<16xf32>
      %152 = vector.shape_cast %151 : vector<16xf32> to vector<16x1xf32>
      %cst_70 = arith.constant 3.200000e+01 : f32
      %153 = vector.broadcast %cst_70 : f32 to vector<16x1xf32>
      %154 = arith.divf %152, %153 : vector<16x1xf32>
      %155 = vector.broadcast %147 : vector<16x1xf32> to vector<16x32xf32>
      %156 = arith.subf %141, %155 : vector<16x32xf32>
      %cst_71 = arith.constant 9.99999974E-6 : f32
      %157 = vector.broadcast %cst_71 : f32 to vector<16x1xf32>
      %158 = arith.addf %154, %157 : vector<16x1xf32>
      %159 = math.rsqrt %158 : vector<16x1xf32>
      %160 = vector.broadcast %159 : vector<16x1xf32> to vector<16x32xf32>
      %161 = arith.mulf %156, %160 : vector<16x32xf32>
      %162 = vector.broadcast %142 : vector<1x32xf32> to vector<16x32xf32>
      %163 = arith.mulf %161, %162 : vector<16x32xf32>
      %164 = vector.broadcast %143 : vector<1x32xf32> to vector<16x32xf32>
      %165 = arith.addf %163, %164 : vector<16x32xf32>
      %166 = arith.truncf %165 : vector<16x32xf32> to vector<16x32xbf16>
      %c0_72 = arith.constant 0 : index
      %c0_73 = arith.constant 0 : index
      %167 = vector.load %arg5[%c0_72, %c0_73] : memref<32x32xbf16, #tpu.memory_space<vmem>>, vector<32x32xbf16>
      %cst_74 = arith.constant dense<0.000000e+00> : vector<16x32xf32>
      %168 = tpu.matmul %166, %167, %cst_74 {dimension_numbers = #tpu.dot_dimension_numbers<[1], [0], [0], [1], [0, 0, 1, 1], [], []>} : vector<16x32xbf16>, vector<32x32xbf16>, vector<16x32xf32> -> vector<16x32xf32>
      %cst_75 = arith.constant 0.353553385 : f32
      %169 = vector.broadcast %cst_75 : f32 to vector<16x32xf32>
      %170 = arith.mulf %168, %169 : vector<16x32xf32>
      %171 = vector.extract_strided_slice %170 {offsets = [0, 0], sizes = [8, 32], strides = [1, 1]} : vector<16x32xf32> to vector<8x32xf32>
      %172 = arith.truncf %171 : vector<8x32xf32> to vector<8x32xbf16>
      %c0_76 = arith.constant 0 : index
      %c0_77 = arith.constant 0 : index
      %c0_78 = arith.constant 0 : index
      %173 = vector.load %arg17[%c0_76, %c0_77, %c0_78] : memref<2x8x32xbf16, #tpu.memory_space<vmem>>, vector<1x8x32xbf16>
      %174 = vector.shape_cast %173 : vector<1x8x32xbf16> to vector<8x32xbf16>
      %175 = vector.shape_cast %172 : vector<8x32xbf16> to vector<1x8x32xbf16>
      tpu.vector_store %arg17[%c0_76, %c0_77, %c0_78], %175 {strides = array<i32>} : memref<2x8x32xbf16, #tpu.memory_space<vmem>>, vector<1x8x32xbf16>,
      %176 = vector.extract_strided_slice %170 {offsets = [8, 0], sizes = [8, 32], strides = [1, 1]} : vector<16x32xf32> to vector<8x32xf32>
      %177 = arith.truncf %176 : vector<8x32xf32> to vector<8x32xbf16>
      %c1 = arith.constant 1 : index
      %c0_79 = arith.constant 0 : index
      %c0_80 = arith.constant 0 : index
      %178 = vector.load %arg17[%c1, %c0_79, %c0_80] : memref<2x8x32xbf16, #tpu.memory_space<vmem>>, vector<1x8x32xbf16>
      %179 = vector.shape_cast %178 : vector<1x8x32xbf16> to vector<8x32xbf16>
      %180 = vector.shape_cast %177 : vector<8x32xbf16> to vector<1x8x32xbf16>
      tpu.vector_store %arg17[%c1, %c0_79, %c0_80], %180 {strides = array<i32>} : memref<2x8x32xbf16, #tpu.memory_space<vmem>>, vector<1x8x32xbf16>,
      %c0_81 = arith.constant 0 : index
      %c0_82 = arith.constant 0 : index
      %181 = vector.load %arg6[%c0_81, %c0_82] : memref<32x32xbf16, #tpu.memory_space<vmem>>, vector<32x32xbf16>
      %cst_83 = arith.constant dense<0.000000e+00> : vector<16x32xf32>
      %182 = tpu.matmul %166, %181, %cst_83 {dimension_numbers = #tpu.dot_dimension_numbers<[1], [0], [0], [1], [0, 0, 1, 1], [], []>} : vector<16x32xbf16>, vector<32x32xbf16>, vector<16x32xf32> -> vector<16x32xf32>
      %183 = arith.truncf %182 : vector<16x32xf32> to vector<16x32xbf16>
      %c0_84 = arith.constant 0 : index
      %c0_85 = arith.constant 0 : index
      %184 = vector.load %arg18[%c0_84, %c0_85] : memref<16x32xbf16, #tpu.memory_space<vmem>>, vector<16x32xbf16>
      tpu.vector_store %arg18[%c0_84, %c0_85], %183 {strides = array<i32>} : memref<16x32xbf16, #tpu.memory_space<vmem>>, vector<16x32xbf16>,
      %c0_86 = arith.constant 0 : index
      %c0_87 = arith.constant 0 : index
      %185 = vector.load %arg7[%c0_86, %c0_87] : memref<32x32xbf16, #tpu.memory_space<vmem>>, vector<32x32xbf16>
      %cst_88 = arith.constant dense<0.000000e+00> : vector<16x32xf32>
      %186 = tpu.matmul %166, %185, %cst_88 {dimension_numbers = #tpu.dot_dimension_numbers<[1], [0], [0], [1], [0, 0, 1, 1], [], []>} : vector<16x32xbf16>, vector<32x32xbf16>, vector<16x32xf32> -> vector<16x32xf32>
      %187 = arith.truncf %186 : vector<16x32xf32> to vector<16x32xbf16>
      %c0_89 = arith.constant 0 : index
      %c0_90 = arith.constant 0 : index
      %188 = vector.load %arg19[%c0_89, %c0_90] : memref<16x32xbf16, #tpu.memory_space<vmem>>, vector<16x32xbf16>
      tpu.vector_store %arg19[%c0_89, %c0_90], %187 {strides = array<i32>} : memref<16x32xbf16, #tpu.memory_space<vmem>>, vector<16x32xbf16>,
    } else {
    }
    %c8_i32 = arith.constant 8 : i32
    %3 = arith.muli %arg1, %c8_i32 : i32
    %4 = tpu.assume_multiple %3, 8 : i32
    %c0 = arith.constant 0 : index
    %5 = arith.index_cast %4 : i32 to index
    %c0_1 = arith.constant 0 : index
    %6 = vector.load %arg2[%c0, %5, %c0_1] : memref<1x16x32xf32, #tpu.memory_space<vmem>>, vector<1x8x32xf32>
    %7 = vector.shape_cast %6 : vector<1x8x32xf32> to vector<8x32xf32>
    %8 = arith.index_cast %arg1 : i32 to index
    %c0_2 = arith.constant 0 : index
    %c0_3 = arith.constant 0 : index
    %9 = vector.load %arg17[%8, %c0_2, %c0_3] : memref<2x8x32xbf16, #tpu.memory_space<vmem>>, vector<1x8x32xbf16>
    %10 = vector.shape_cast %9 : vector<1x8x32xbf16> to vector<8x32xbf16>
    %c0_4 = arith.constant 0 : index
    %c0_5 = arith.constant 0 : index
    %11 = vector.load %arg18[%c0_4, %c0_5] : memref<16x32xbf16, #tpu.memory_space<vmem>>, vector<16x32xbf16>
    %c0_6 = arith.constant 0 : index
    %c0_7 = arith.constant 0 : index
    %12 = vector.load %arg19[%c0_6, %c0_7] : memref<16x32xbf16, #tpu.memory_space<vmem>>, vector<16x32xbf16>
    %13 = vector.extract_strided_slice %10 {offsets = [0, 0], sizes = [8, 8], strides = [1, 1]} : vector<8x32xbf16> to vector<8x8xbf16>
    %14 = vector.extract_strided_slice %11 {offsets = [0, 0], sizes = [16, 8], strides = [1, 1]} : vector<16x32xbf16> to vector<16x8xbf16>
    %cst = arith.constant dense<0.000000e+00> : vector<8x16xf32>
    %15 = tpu.matmul %13, %14, %cst {dimension_numbers = #tpu.dot_dimension_numbers<[1], [1], [0], [0], [0, 0, 1, 0], [], []>} : vector<8x8xbf16>, vector<16x8xbf16>, vector<8x16xf32> -> vector<8x16xf32>
    %cst_8 = arith.constant dense<0xFF800000> : vector<8xf32>
    %16 = vector.multi_reduction <maximumf>, %15, %cst_8 [1] : vector<8x16xf32> to vector<8xf32>
    %17 = vector.shape_cast %16 : vector<8xf32> to vector<8x1xf32>
    %18 = vector.broadcast %17 : vector<8x1xf32> to vector<8x16xf32>
    %19 = arith.subf %15, %18 : vector<8x16xf32>
    %20 = math.exp %19 : vector<8x16xf32>
    %cst_9 = arith.constant dense<0.000000e+00> : vector<8xf32>
    %21 = vector.multi_reduction <add>, %20, %cst_9 [1] : vector<8x16xf32> to vector<8xf32>
    %22 = vector.shape_cast %21 : vector<8xf32> to vector<8x1xf32>
    %23 = tpu.reciprocal %22 {approx = true} : vector<8x1xf32> -> vector<8x1xf32>
    %24 = vector.broadcast %23 : vector<8x1xf32> to vector<8x16xf32>
    %25 = arith.mulf %20, %24 : vector<8x16xf32>
    %26 = arith.truncf %25 : vector<8x16xf32> to vector<8x16xbf16>
    %27 = vector.extract_strided_slice %12 {offsets = [0, 0], sizes = [16, 8], strides = [1, 1]} : vector<16x32xbf16> to vector<16x8xbf16>
    %cst_10 = arith.constant dense<0.000000e+00> : vector<8x8xf32>
    %28 = tpu.matmul %26, %27, %cst_10 {dimension_numbers = #tpu.dot_dimension_numbers<[1], [0], [0], [1], [0, 0, 1, 1], [], []>} : vector<8x16xbf16>, vector<16x8xbf16>, vector<8x8xf32> -> vector<8x8xf32>
    %29 = arith.truncf %28 : vector<8x8xf32> to vector<8x8xbf16>
    %c0_11 = arith.constant 0 : index
    %c0_12 = arith.constant 0 : index
    %30 = vector.load %arg20[%c0_11, %c0_12] : memref<8x32xbf16, #tpu.memory_space<vmem>>, vector<8x8xbf16>
    tpu.vector_store %arg20[%c0_11, %c0_12], %29 {strides = array<i32>} : memref<8x32xbf16, #tpu.memory_space<vmem>>, vector<8x8xbf16>,
    %31 = vector.extract_strided_slice %10 {offsets = [0, 8], sizes = [8, 8], strides = [1, 1]} : vector<8x32xbf16> to vector<8x8xbf16>
    %32 = vector.extract_strided_slice %11 {offsets = [0, 8], sizes = [16, 8], strides = [1, 1]} : vector<16x32xbf16> to vector<16x8xbf16>
    %cst_13 = arith.constant dense<0.000000e+00> : vector<8x16xf32>
    %33 = tpu.matmul %31, %32, %cst_13 {dimension_numbers = #tpu.dot_dimension_numbers<[1], [1], [0], [0], [0, 0, 1, 0], [], []>} : vector<8x8xbf16>, vector<16x8xbf16>, vector<8x16xf32> -> vector<8x16xf32>
    %cst_14 = arith.constant dense<0xFF800000> : vector<8xf32>
    %34 = vector.multi_reduction <maximumf>, %33, %cst_14 [1] : vector<8x16xf32> to vector<8xf32>
    %35 = vector.shape_cast %34 : vector<8xf32> to vector<8x1xf32>
    %36 = vector.broadcast %35 : vector<8x1xf32> to vector<8x16xf32>
    %37 = arith.subf %33, %36 : vector<8x16xf32>
    %38 = math.exp %37 : vector<8x16xf32>
    %cst_15 = arith.constant dense<0.000000e+00> : vector<8xf32>
    %39 = vector.multi_reduction <add>, %38, %cst_15 [1] : vector<8x16xf32> to vector<8xf32>
    %40 = vector.shape_cast %39 : vector<8xf32> to vector<8x1xf32>
    %41 = tpu.reciprocal %40 {approx = true} : vector<8x1xf32> -> vector<8x1xf32>
    %42 = vector.broadcast %41 : vector<8x1xf32> to vector<8x16xf32>
    %43 = arith.mulf %38, %42 : vector<8x16xf32>
    %44 = arith.truncf %43 : vector<8x16xf32> to vector<8x16xbf16>
    %45 = vector.extract_strided_slice %12 {offsets = [0, 8], sizes = [16, 8], strides = [1, 1]} : vector<16x32xbf16> to vector<16x8xbf16>
    %cst_16 = arith.constant dense<0.000000e+00> : vector<8x8xf32>
    %46 = tpu.matmul %44, %45, %cst_16 {dimension_numbers = #tpu.dot_dimension_numbers<[1], [0], [0], [1], [0, 0, 1, 1], [], []>} : vector<8x16xbf16>, vector<16x8xbf16>, vector<8x8xf32> -> vector<8x8xf32>
    %47 = arith.truncf %46 : vector<8x8xf32> to vector<8x8xbf16>
    %c0_17 = arith.constant 0 : index
    %c8 = arith.constant 8 : index
    %48 = vector.load %arg20[%c0_17, %c8] : memref<8x32xbf16, #tpu.memory_space<vmem>>, vector<8x8xbf16>
    tpu.vector_store %arg20[%c0_17, %c8], %47 {strides = array<i32>} : memref<8x32xbf16, #tpu.memory_space<vmem>>, vector<8x8xbf16>,
    %49 = vector.extract_strided_slice %10 {offsets = [0, 16], sizes = [8, 8], strides = [1, 1]} : vector<8x32xbf16> to vector<8x8xbf16>
    %50 = vector.extract_strided_slice %11 {offsets = [0, 16], sizes = [16, 8], strides = [1, 1]} : vector<16x32xbf16> to vector<16x8xbf16>
    %cst_18 = arith.constant dense<0.000000e+00> : vector<8x16xf32>
    %51 = tpu.matmul %49, %50, %cst_18 {dimension_numbers = #tpu.dot_dimension_numbers<[1], [1], [0], [0], [0, 0, 1, 0], [], []>} : vector<8x8xbf16>, vector<16x8xbf16>, vector<8x16xf32> -> vector<8x16xf32>
    %cst_19 = arith.constant dense<0xFF800000> : vector<8xf32>
    %52 = vector.multi_reduction <maximumf>, %51, %cst_19 [1] : vector<8x16xf32> to vector<8xf32>
    %53 = vector.shape_cast %52 : vector<8xf32> to vector<8x1xf32>
    %54 = vector.broadcast %53 : vector<8x1xf32> to vector<8x16xf32>
    %55 = arith.subf %51, %54 : vector<8x16xf32>
    %56 = math.exp %55 : vector<8x16xf32>
    %cst_20 = arith.constant dense<0.000000e+00> : vector<8xf32>
    %57 = vector.multi_reduction <add>, %56, %cst_20 [1] : vector<8x16xf32> to vector<8xf32>
    %58 = vector.shape_cast %57 : vector<8xf32> to vector<8x1xf32>
    %59 = tpu.reciprocal %58 {approx = true} : vector<8x1xf32> -> vector<8x1xf32>
    %60 = vector.broadcast %59 : vector<8x1xf32> to vector<8x16xf32>
    %61 = arith.mulf %56, %60 : vector<8x16xf32>
    %62 = arith.truncf %61 : vector<8x16xf32> to vector<8x16xbf16>
    %63 = vector.extract_strided_slice %12 {offsets = [0, 16], sizes = [16, 8], strides = [1, 1]} : vector<16x32xbf16> to vector<16x8xbf16>
    %cst_21 = arith.constant dense<0.000000e+00> : vector<8x8xf32>
    %64 = tpu.matmul %62, %63, %cst_21 {dimension_numbers = #tpu.dot_dimension_numbers<[1], [0], [0], [1], [0, 0, 1, 1], [], []>} : vector<8x16xbf16>, vector<16x8xbf16>, vector<8x8xf32> -> vector<8x8xf32>
    %65 = arith.truncf %64 : vector<8x8xf32> to vector<8x8xbf16>
    %c0_22 = arith.constant 0 : index
    %c16 = arith.constant 16 : index
    %66 = vector.load %arg20[%c0_22, %c16] : memref<8x32xbf16, #tpu.memory_space<vmem>>, vector<8x8xbf16>
    tpu.vector_store %arg20[%c0_22, %c16], %65 {strides = array<i32>} : memref<8x32xbf16, #tpu.memory_space<vmem>>, vector<8x8xbf16>,
    %67 = vector.extract_strided_slice %10 {offsets = [0, 24], sizes = [8, 8], strides = [1, 1]} : vector<8x32xbf16> to vector<8x8xbf16>
    %68 = vector.extract_strided_slice %11 {offsets = [0, 24], sizes = [16, 8], strides = [1, 1]} : vector<16x32xbf16> to vector<16x8xbf16>
    %cst_23 = arith.constant dense<0.000000e+00> : vector<8x16xf32>
    %69 = tpu.matmul %67, %68, %cst_23 {dimension_numbers = #tpu.dot_dimension_numbers<[1], [1], [0], [0], [0, 0, 1, 0], [], []>} : vector<8x8xbf16>, vector<16x8xbf16>, vector<8x16xf32> -> vector<8x16xf32>
    %cst_24 = arith.constant dense<0xFF800000> : vector<8xf32>
    %70 = vector.multi_reduction <maximumf>, %69, %cst_24 [1] : vector<8x16xf32> to vector<8xf32>
    %71 = vector.shape_cast %70 : vector<8xf32> to vector<8x1xf32>
    %72 = vector.broadcast %71 : vector<8x1xf32> to vector<8x16xf32>
    %73 = arith.subf %69, %72 : vector<8x16xf32>
    %74 = math.exp %73 : vector<8x16xf32>
    %cst_25 = arith.constant dense<0.000000e+00> : vector<8xf32>
    %75 = vector.multi_reduction <add>, %74, %cst_25 [1] : vector<8x16xf32> to vector<8xf32>
    %76 = vector.shape_cast %75 : vector<8xf32> to vector<8x1xf32>
    %77 = tpu.reciprocal %76 {approx = true} : vector<8x1xf32> -> vector<8x1xf32>
    %78 = vector.broadcast %77 : vector<8x1xf32> to vector<8x16xf32>
    %79 = arith.mulf %74, %78 : vector<8x16xf32>
    %80 = arith.truncf %79 : vector<8x16xf32> to vector<8x16xbf16>
    %81 = vector.extract_strided_slice %12 {offsets = [0, 24], sizes = [16, 8], strides = [1, 1]} : vector<16x32xbf16> to vector<16x8xbf16>
    %cst_26 = arith.constant dense<0.000000e+00> : vector<8x8xf32>
    %82 = tpu.matmul %80, %81, %cst_26 {dimension_numbers = #tpu.dot_dimension_numbers<[1], [0], [0], [1], [0, 0, 1, 1], [], []>} : vector<8x16xbf16>, vector<16x8xbf16>, vector<8x8xf32> -> vector<8x8xf32>
    %83 = arith.truncf %82 : vector<8x8xf32> to vector<8x8xbf16>
    %c0_27 = arith.constant 0 : index
    %c24 = arith.constant 24 : index
    %84 = vector.load %arg20[%c0_27, %c24] : memref<8x32xbf16, #tpu.memory_space<vmem>>, vector<8x8xbf16>
    tpu.vector_store %arg20[%c0_27, %c24], %83 {strides = array<i32>} : memref<8x32xbf16, #tpu.memory_space<vmem>>, vector<8x8xbf16>,
    %c0_28 = arith.constant 0 : index
    %c0_29 = arith.constant 0 : index
    %85 = vector.load %arg20[%c0_28, %c0_29] : memref<8x32xbf16, #tpu.memory_space<vmem>>, vector<8x32xbf16>
    %c0_30 = arith.constant 0 : index
    %c0_31 = arith.constant 0 : index
    %86 = vector.load %arg8[%c0_30, %c0_31] : memref<32x32xbf16, #tpu.memory_space<vmem>>, vector<32x32xbf16>
    %cst_32 = arith.constant dense<0.000000e+00> : vector<8x32xf32>
    %87 = tpu.matmul %85, %86, %cst_32 {dimension_numbers = #tpu.dot_dimension_numbers<[1], [0], [0], [1], [0, 0, 1, 1], [], []>} : vector<8x32xbf16>, vector<32x32xbf16>, vector<8x32xf32> -> vector<8x32xf32>
    %c0_33 = arith.constant 0 : index
    %c0_34 = arith.constant 0 : index
    %88 = vector.load %arg9[%c0_33, %c0_34] : memref<1x32xf32, #tpu.memory_space<vmem>>, vector<1x32xf32>
    %89 = vector.broadcast %88 : vector<1x32xf32> to vector<8x32xf32>
    %90 = arith.addf %87, %89 : vector<8x32xf32>
    %91 = arith.addf %7, %90 : vector<8x32xf32>
    %c0_35 = arith.constant 0 : index
    %c0_36 = arith.constant 0 : index
    %92 = vector.load %arg10[%c0_35, %c0_36] : memref<1x32xf32, #tpu.memory_space<vmem>>, vector<1x32xf32>
    %c0_37 = arith.constant 0 : index
    %c0_38 = arith.constant 0 : index
    %93 = vector.load %arg11[%c0_37, %c0_38] : memref<1x32xf32, #tpu.memory_space<vmem>>, vector<1x32xf32>
    %cst_39 = arith.constant dense<0.000000e+00> : vector<8xf32>
    %94 = vector.multi_reduction <add>, %91, %cst_39 [1] : vector<8x32xf32> to vector<8xf32>
    %95 = vector.shape_cast %94 : vector<8xf32> to vector<8x1xf32>
    %cst_40 = arith.constant 3.200000e+01 : f32
    %96 = vector.broadcast %cst_40 : f32 to vector<8x1xf32>
    %97 = arith.divf %95, %96 : vector<8x1xf32>
    %98 = vector.broadcast %97 : vector<8x1xf32> to vector<8x32xf32>
    %99 = arith.subf %91, %98 : vector<8x32xf32>
    %100 = arith.mulf %99, %99 : vector<8x32xf32>
    %cst_41 = arith.constant dense<0.000000e+00> : vector<8xf32>
    %101 = vector.multi_reduction <add>, %100, %cst_41 [1] : vector<8x32xf32> to vector<8xf32>
    %102 = vector.shape_cast %101 : vector<8xf32> to vector<8x1xf32>
    %cst_42 = arith.constant 3.200000e+01 : f32
    %103 = vector.broadcast %cst_42 : f32 to vector<8x1xf32>
    %104 = arith.divf %102, %103 : vector<8x1xf32>
    %105 = vector.broadcast %97 : vector<8x1xf32> to vector<8x32xf32>
    %106 = arith.subf %91, %105 : vector<8x32xf32>
    %cst_43 = arith.constant 9.99999974E-6 : f32
    %107 = vector.broadcast %cst_43 : f32 to vector<8x1xf32>
    %108 = arith.addf %104, %107 : vector<8x1xf32>
    %109 = math.rsqrt %108 : vector<8x1xf32>
    %110 = vector.broadcast %109 : vector<8x1xf32> to vector<8x32xf32>
    %111 = arith.mulf %106, %110 : vector<8x32xf32>
    %112 = vector.broadcast %92 : vector<1x32xf32> to vector<8x32xf32>
    %113 = arith.mulf %111, %112 : vector<8x32xf32>
    %114 = vector.broadcast %93 : vector<1x32xf32> to vector<8x32xf32>
    %115 = arith.addf %113, %114 : vector<8x32xf32>
    %116 = arith.truncf %115 : vector<8x32xf32> to vector<8x32xbf16>
    %c0_44 = arith.constant 0 : index
    %c0_45 = arith.constant 0 : index
    %117 = vector.load %arg12[%c0_44, %c0_45] : memref<32x128xbf16, #tpu.memory_space<vmem>>, vector<32x128xbf16>
    %cst_46 = arith.constant dense<0.000000e+00> : vector<8x128xf32>
    %118 = tpu.matmul %116, %117, %cst_46 {dimension_numbers = #tpu.dot_dimension_numbers<[1], [0], [0], [1], [0, 0, 1, 1], [], []>} : vector<8x32xbf16>, vector<32x128xbf16>, vector<8x128xf32> -> vector<8x128xf32>
    %c0_47 = arith.constant 0 : index
    %c0_48 = arith.constant 0 : index
    %119 = vector.load %arg13[%c0_47, %c0_48] : memref<1x128xf32, #tpu.memory_space<vmem>>, vector<1x128xf32>
    %120 = vector.broadcast %119 : vector<1x128xf32> to vector<8x128xf32>
    %121 = arith.addf %118, %120 : vector<8x128xf32>
    %cst_49 = arith.constant 5.000000e-01 : f32
    %122 = vector.broadcast %cst_49 : f32 to vector<8x128xf32>
    %123 = arith.mulf %122, %121 : vector<8x128xf32>
    %cst_50 = arith.constant 0.707106769 : f32
    %124 = vector.broadcast %cst_50 : f32 to vector<8x128xf32>
    %125 = arith.mulf %121, %124 : vector<8x128xf32>
    %126 = math.erf %125 : vector<8x128xf32>
    %cst_51 = arith.constant 1.000000e+00 : f32
    %127 = vector.broadcast %cst_51 : f32 to vector<8x128xf32>
    %128 = arith.addf %127, %126 : vector<8x128xf32>
    %129 = arith.mulf %123, %128 : vector<8x128xf32>
    %130 = arith.truncf %129 : vector<8x128xf32> to vector<8x128xbf16>
    %c0_52 = arith.constant 0 : index
    %c0_53 = arith.constant 0 : index
    %131 = vector.load %arg14[%c0_52, %c0_53] : memref<128x32xbf16, #tpu.memory_space<vmem>>, vector<128x32xbf16>
    %cst_54 = arith.constant dense<0.000000e+00> : vector<8x32xf32>
    %132 = tpu.matmul %130, %131, %cst_54 {dimension_numbers = #tpu.dot_dimension_numbers<[1], [0], [0], [1], [0, 0, 1, 1], [], []>} : vector<8x128xbf16>, vector<128x32xbf16>, vector<8x32xf32> -> vector<8x32xf32>
    %c0_55 = arith.constant 0 : index
    %c0_56 = arith.constant 0 : index
    %133 = vector.load %arg15[%c0_55, %c0_56] : memref<1x32xf32, #tpu.memory_space<vmem>>, vector<1x32xf32>
    %134 = vector.broadcast %133 : vector<1x32xf32> to vector<8x32xf32>
    %135 = arith.addf %132, %134 : vector<8x32xf32>
    %136 = arith.addf %91, %135 : vector<8x32xf32>
    %c0_57 = arith.constant 0 : index
    %c0_58 = arith.constant 0 : index
    %c0_59 = arith.constant 0 : index
    %137 = vector.load %arg16[%c0_57, %c0_58, %c0_59] : memref<1x8x32xf32, #tpu.memory_space<vmem>>, vector<1x8x32xf32>
    %138 = vector.shape_cast %137 : vector<1x8x32xf32> to vector<8x32xf32>
    %139 = vector.shape_cast %136 : vector<8x32xf32> to vector<1x8x32xf32>
    tpu.vector_store %arg16[%c0_57, %c0_58, %c0_59], %139 {strides = array<i32>} : memref<1x8x32xf32, #tpu.memory_space<vmem>>, vector<1x8x32xf32>,
    return
  }
  func.func @transform_0(%arg0: i32, %arg1: i32) -> (i32, i32, i32) {
    %c0_i32 = arith.constant 0 : i32
    %c0_i32_0 = arith.constant 0 : i32
    %c0_i32_1 = arith.constant 0 : i32
    return %arg0, %c0_i32, %c0_i32_0 : i32, i32, i32
  }
  func.func @transform_1(%arg0: i32, %arg1: i32) -> (i32, i32) {
    %c0_i32 = arith.constant 0 : i32
    %c0_i32_0 = arith.constant 0 : i32
    %c0_i32_1 = arith.constant 0 : i32
    return %c0_i32, %c0_i32_0 : i32, i32
  }
  func.func @transform_2(%arg0: i32, %arg1: i32) -> (i32, i32) {
    %c0_i32 = arith.constant 0 : i32
    %c0_i32_0 = arith.constant 0 : i32
    %c0_i32_1 = arith.constant 0 : i32
    return %c0_i32, %c0_i32_0 : i32, i32
  }
  func.func @transform_3(%arg0: i32, %arg1: i32) -> (i32, i32) {
    %c0_i32 = arith.constant 0 : i32
    %c0_i32_0 = arith.constant 0 : i32
    %c0_i32_1 = arith.constant 0 : i32
    return %c0_i32, %c0_i32_0 : i32, i32
  }
  func.func @transform_4(%arg0: i32, %arg1: i32) -> (i32, i32) {
    %c0_i32 = arith.constant 0 : i32
    %c0_i32_0 = arith.constant 0 : i32
    %c0_i32_1 = arith.constant 0 : i32
    return %c0_i32, %c0_i32_0 : i32, i32
  }
  func.func @transform_5(%arg0: i32, %arg1: i32) -> (i32, i32) {
    %c0_i32 = arith.constant 0 : i32
    %c0_i32_0 = arith.constant 0 : i32
    %c0_i32_1 = arith.constant 0 : i32
    return %c0_i32, %c0_i32_0 : i32, i32
  }
  func.func @transform_6(%arg0: i32, %arg1: i32) -> (i32, i32) {
    %c0_i32 = arith.constant 0 : i32
    %c0_i32_0 = arith.constant 0 : i32
    %c0_i32_1 = arith.constant 0 : i32
    return %c0_i32, %c0_i32_0 : i32, i32
  }
  func.func @transform_7(%arg0: i32, %arg1: i32) -> (i32, i32) {
    %c0_i32 = arith.constant 0 : i32
    %c0_i32_0 = arith.constant 0 : i32
    %c0_i32_1 = arith.constant 0 : i32
    return %c0_i32, %c0_i32_0 : i32, i32
  }
  func.func @transform_8(%arg0: i32, %arg1: i32) -> (i32, i32) {
    %c0_i32 = arith.constant 0 : i32
    %c0_i32_0 = arith.constant 0 : i32
    %c0_i32_1 = arith.constant 0 : i32
    return %c0_i32, %c0_i32_0 : i32, i32
  }
  func.func @transform_9(%arg0: i32, %arg1: i32) -> (i32, i32) {
    %c0_i32 = arith.constant 0 : i32
    %c0_i32_0 = arith.constant 0 : i32
    %c0_i32_1 = arith.constant 0 : i32
    return %c0_i32, %c0_i32_0 : i32, i32
  }
  func.func @transform_10(%arg0: i32, %arg1: i32) -> (i32, i32) {
    %c0_i32 = arith.constant 0 : i32
    %c0_i32_0 = arith.constant 0 : i32
    %c0_i32_1 = arith.constant 0 : i32
    return %c0_i32, %c0_i32_0 : i32, i32
  }
  func.func @transform_11(%arg0: i32, %arg1: i32) -> (i32, i32) {
    %c0_i32 = arith.constant 0 : i32
    %c0_i32_0 = arith.constant 0 : i32
    %c0_i32_1 = arith.constant 0 : i32
    return %c0_i32, %c0_i32_0 : i32, i32
  }
  func.func @transform_12(%arg0: i32, %arg1: i32) -> (i32, i32) {
    %c0_i32 = arith.constant 0 : i32
    %c0_i32_0 = arith.constant 0 : i32
    %c0_i32_1 = arith.constant 0 : i32
    return %c0_i32, %c0_i32_0 : i32, i32
  }
  func.func @transform_13(%arg0: i32, %arg1: i32) -> (i32, i32) {
    %c0_i32 = arith.constant 0 : i32
    %c0_i32_0 = arith.constant 0 : i32
    %c0_i32_1 = arith.constant 0 : i32
    return %c0_i32, %c0_i32_0 : i32, i32
  }
  func.func @transform_14(%arg0: i32, %arg1: i32) -> (i32, i32, i32) {
    %c0_i32 = arith.constant 0 : i32
    %c0_i32_0 = arith.constant 0 : i32
    return %arg0, %arg1, %c0_i32 : i32, i32, i32
  }
}

</mosaic_0001>

<llo_original>
// kernel: tpu_custom_call.1
$region0: #{tpu_custom_call.1}
  #allocation0 [shape = 'u32[]', space=smem, size = 0x4, offset = 0x4, fixed_abs, tag = 'smem constant byte address 0x4 - core index']
  #allocation1 [shape = 'u32[144,128]{1,0:T(1,128)}', space=vmem, size = 0x12000, scoped, tag = 'internal scratch']
  #allocation2 [shape = 'bf16[2,8,32]{2,1,0:T(8,128)(2,1)}', space=vmem, size = 0x1000, scoped, tag = 'scratch operand']
  #allocation3 [shape = 'bf16[16,32]{1,0:T(16,128)(2,1)}', space=vmem, size = 0x1000, scoped, tag = 'scratch operand']
  #allocation4 [shape = 'bf16[16,32]{1,0:T(16,128)(2,1)}', space=vmem, size = 0x1000, scoped, tag = 'scratch operand']
  #allocation5 [shape = 'bf16[8,32]{1,0:T(8,128)(2,1)}', space=vmem, size = 0x800, scoped, tag = 'scratch operand']
  %s0 = inlined_call_operand.vmem [shape: f32[2,16,32], index: 0, kind: input, shape index: {}]
  %s1 = inlined_call_operand.vmem [shape: f32[1,32], index: 1, kind: input, shape index: {}]
  %s2 = inlined_call_operand.vmem [shape: f32[1,32], index: 2, kind: input, shape index: {}]
  %s3 = inlined_call_operand.vmem [shape: bf16[32,32], index: 3, kind: input, shape index: {}]
  %s4 = inlined_call_operand.vmem [shape: bf16[32,32], index: 4, kind: input, shape index: {}]
  %s5 = inlined_call_operand.vmem [shape: bf16[32,32], index: 5, kind: input, shape index: {}]
  %s6 = inlined_call_operand.hbm [shape: bf16[32,32], index: 6, kind: input, shape index: {}]
  %s7 = inlined_call_operand.hbm [shape: f32[1,32], index: 7, kind: input, shape index: {}]
  %s8 = inlined_call_operand.hbm [shape: f32[1,32], index: 8, kind: input, shape index: {}]
  %s9 = inlined_call_operand.hbm [shape: f32[1,32], index: 9, kind: input, shape index: {}]
  %s10 = inlined_call_operand.vmem [shape: bf16[32,128], index: 10, kind: input, shape index: {}]
  %s11 = inlined_call_operand.vmem [shape: f32[1,128], index: 11, kind: input, shape index: {}]
  %s12 = inlined_call_operand.vmem [shape: bf16[128,32], index: 12, kind: input, shape index: {}]
  %s13 = inlined_call_operand.vmem [shape: f32[1,32], index: 13, kind: input, shape index: {}]
  %s14 = inlined_call_operand.hbm [shape: f32[2,16,32], index: 14, kind: output, shape index: {}]
  %s15 = sld [smem:[#allocation0]]
  $region109: #{tpu_custom_call.1} parent=0
    _
  %s17 = ssub.s32 1, %s15
  %s18 = scalar_select 0, %s17, %s15
  $region1: #{tpu_custom_call.1} parent=0
    #allocation6 [shape = 'u8[8192]{0}', space=vmem, size = 0x2000, scoped, tag = 'input window, operand 6, single buffered']
    #allocation7 [shape = 's32[2]{0}', space=sflag, size = 0x8, scoped, tag = 'scoped memory for tpu_custom_call.1']
    #allocation8 [shape = 's32[2]{0}', space=sflag, size = 0x8, scoped, tag = 'scoped memory for tpu_custom_call.1']
    #allocation9 [shape = 'u8[512]{0}', space=vmem, size = 0x400, scoped, tag = 'input window, operand 7, single buffered']
    #allocation10 [shape = 's32[1]{0}', space=sflag, size = 0x4, scoped, tag = 'scoped memory for tpu_custom_call.1']
    #allocation11 [shape = 'u8[512]{0}', space=vmem, size = 0x400, scoped, tag = 'input window, operand 8, single buffered']
    #allocation12 [shape = 'u8[512]{0}', space=vmem, size = 0x400, scoped, tag = 'input window, operand 9, single buffered']
    #allocation13 [shape = 's32[1]{0}', space=sflag, size = 0x4, scoped, tag = 'scoped memory for tpu_custom_call.1']
    #allocation14 [shape = 'u8[8192]{0}', space=vmem, size = 0x2000, scoped, tag = 'output window, operand 0']
    %19 = vsyncpa [#allocation7], 0
    %20 = vsyncpa [#allocation10], 0
    %21 = vsyncpa [#allocation13], 0
    %22 = vsyncpa [#allocation8], 0
    %s23 = scalar_lea.sflag [#allocation8], 1
    %24 = vsyncpa %s23, 0
    loop: start=0, step=1, limit=6
    $region2: #{tpu_custom_call.1} parent=1 // loop_pre_header
      _
    $region3: #{tpu_custom_call.1} parent=1 // loop_header
      %s26 = sphi 0, %s30
      %p27 = scmp.ge.s32.totalorder %s26, 6
      %s33 = sphi 0, %s45
      %s34 = sphi 0, %s41
      %s35 = sphi 0, %s33
      %s36 = sphi 0, %s34
      %s37 = sphi 0, %s35
      %s38 = sphi 0, %s36
      %s48 = sphi 0, %s50
      %s51 = sphi 0, %s48
      %s52 = sphi 0, %s51
      %s68 = sphi 0, %s52
      %s72 = sphi 0, %s72
      %s74 = sphi 0, %s72
      %s75 = sphi 0, %s74
      %s89 = sphi 0, %s75
      %s93 = sphi 0, %s93
      %s95 = sphi 0, %s93
      %s96 = sphi 0, %s95
      %s110 = sphi 0, %s96
      %s114 = sphi 0, %s114
      %s116 = sphi 0, %s114
      %s117 = sphi 0, %s116
      %s131 = sphi 0, %s117
      %s135 = sphi 0, %s135
      %s137 = sphi 0, %s135
      %s138 = sphi 0, %s137
      %s152 = sphi 0, %s138
      %s156 = sphi 0, %s156
      %s158 = sphi 0, %s156
      %s159 = sphi 0, %s158
      %s173 = sphi 0, %s159
      %s177 = sphi 0, %s177
      %s179 = sphi 0, %s177
      %s180 = sphi 0, %s179
      %s194 = sphi 0, %s180
      %s198 = sphi 0, %s198
      %s200 = sphi 0, %s198
      %s201 = sphi 0, %s200
      %s215 = sphi 0, %s201
      %s219 = sphi 0, %s219
      %s221 = sphi 0, %s219
      %s222 = sphi 0, %s221
      %s236 = sphi 0, %s222
      %s240 = sphi 0, %s240
      %s242 = sphi 0, %s240
      %s243 = sphi 0, %s242
      %s257 = sphi 0, %s243
      %s261 = sphi 0, %s261
      %s263 = sphi 0, %s261
      %s264 = sphi 0, %s263
      %s278 = sphi 0, %s264
      %s282 = sphi 0, %s282
      %s284 = sphi 0, %s282
      %s285 = sphi 0, %s284
      %s299 = sphi 0, %s285
      %s303 = sphi 0, %s303
      %s305 = sphi 0, %s303
      %s306 = sphi 0, %s305
      %s320 = sphi 0, %s306
      %s324 = sphi 0, %s324
      %s326 = sphi 0, %s324
      %s327 = sphi 0, %s326
      %s341 = sphi 0, %s327
      %s349 = sphi 0, %s351
      %s352 = sphi 0, %s349
      %s353 = sphi 0, %s352
      %s369 = sphi 0, %s353
    $region4: #{tpu_custom_call.1} parent=1 // loop_header_branch
      %29 = sbr.rel (%p27) target = $region8
    $region5: #{tpu_custom_call.1} parent=1 // loop_body
      %s31 = ssub.s32 %s26, 1
      %s32 = ssub.s32 %s26, 2
      %s39 = sadd.s32 1, %s34
      %p40 = scmp.ge.s32.totalorder %s39, 2
      %s41 = scalar_select %p40, 0, %s39
      %s42 = sadd.s32 1, %s33
      %s43 = scalar_select %p40, %s42, %s33
      %p44 = scmp.ge.s32.totalorder %s43, 2
      %s45 = scalar_select %p44, 0, %s43
      %s46 = ssub.s32 %s33, %s45
      %p47 = scmp.eq.s32.totalorder %s46, 0
      %s49 = sadd.s32 %s48, 1
      %s50 = scalar_select %p47, %s48, %s49
      %p53 = pneg %p47
      %p54 = scmp.eq.s32.totalorder %s26, 3
      %p55 = por %p53, %p54
      %p56 = scmp.ne.s32.totalorder %s48, %s51
      %p57 = scmp.eq.s32.totalorder %s26, 0
      %p58 = por %p56, %p57
      %p59 = scmp.ne.s32.totalorder %s48, %s51
      %p60 = scmp.eq.s32.totalorder %s31, 3
      %p61 = por %p59, %p60
      %p62 = scmp.ne.s32.totalorder %s51, %s52
      %p63 = scmp.eq.s32.totalorder %s31, 0
      %p64 = por %p62, %p63
      %p65 = scmp.ne.s32.totalorder %s51, %s52
      %p66 = scmp.eq.s32.totalorder %s32, 3
      %p67 = por %p65, %p66
      %p69 = scmp.ne.s32.totalorder %s52, %s68
      %p70 = scmp.eq.s32.totalorder %s32, 0
      %p71 = por %p69, %p70
      %s73 = sadd.s32 %s72, 1
      %p76 = scmp.eq.s32.totalorder %s26, 3
      %p77 = scmp.ne.s32.totalorder %s72, %s74
      %p78 = scmp.eq.s32.totalorder %s26, 0
      %p79 = por %p77, %p78
      %p80 = scmp.ne.s32.totalorder %s72, %s74
      %p81 = scmp.eq.s32.totalorder %s31, 3
      %p82 = por %p80, %p81
      %p83 = scmp.ne.s32.totalorder %s74, %s75
      %p84 = scmp.eq.s32.totalorder %s31, 0
      %p85 = por %p83, %p84
      %p86 = scmp.ne.s32.totalorder %s74, %s75
      %p87 = scmp.eq.s32.totalorder %s32, 3
      %p88 = por %p86, %p87
      %p90 = scmp.ne.s32.totalorder %s75, %s89
      %p91 = scmp.eq.s32.totalorder %s32, 0
      %p92 = por %p90, %p91
      %s94 = sadd.s32 %s93, 1
      %p97 = scmp.eq.s32.totalorder %s26, 3
      %p98 = scmp.ne.s32.totalorder %s93, %s95
      %p99 = scmp.eq.s32.totalorder %s26, 0
      %p100 = por %p98, %p99
      %p101 = scmp.ne.s32.totalorder %s93, %s95
      %p102 = scmp.eq.s32.totalorder %s31, 3
      %p103 = por %p101, %p102
      %p104 = scmp.ne.s32.totalorder %s95, %s96
      %p105 = scmp.eq.s32.totalorder %s31, 0
      %p106 = por %p104, %p105
      %p107 = scmp.ne.s32.totalorder %s95, %s96
      %p108 = scmp.eq.s32.totalorder %s32, 3
      %p109 = por %p107, %p108
      %p111 = scmp.ne.s32.totalorder %s96, %s110
      %p112 = scmp.eq.s32.totalorder %s32, 0
      %p113 = por %p111, %p112
      %s115 = sadd.s32 %s114, 1
      %p118 = scmp.eq.s32.totalorder %s26, 3
      %p119 = scmp.ne.s32.totalorder %s114, %s116
      %p120 = scmp.eq.s32.totalorder %s26, 0
      %p121 = por %p119, %p120
      %p122 = scmp.ne.s32.totalorder %s114, %s116
      %p123 = scmp.eq.s32.totalorder %s31, 3
      %p124 = por %p122, %p123
      %p125 = scmp.ne.s32.totalorder %s116, %s117
      %p126 = scmp.eq.s32.totalorder %s31, 0
      %p127 = por %p125, %p126
      %p128 = scmp.ne.s32.totalorder %s116, %s117
      %p129 = scmp.eq.s32.totalorder %s32, 3
      %p130 = por %p128, %p129
      %p132 = scmp.ne.s32.totalorder %s117, %s131
      %p133 = scmp.eq.s32.totalorder %s32, 0
      %p134 = por %p132, %p133
      %s136 = sadd.s32 %s135, 1
      %p139 = scmp.eq.s32.totalorder %s26, 3
      %p140 = scmp.ne.s32.totalorder %s135, %s137
      %p141 = scmp.eq.s32.totalorder %s26, 0
      %p142 = por %p140, %p141
      %p143 = scmp.ne.s32.totalorder %s135, %s137
      %p144 = scmp.eq.s32.totalorder %s31, 3
      %p145 = por %p143, %p144
      %p146 = scmp.ne.s32.totalorder %s137, %s138
      %p147 = scmp.eq.s32.totalorder %s31, 0
      %p148 = por %p146, %p147
      %p149 = scmp.ne.s32.totalorder %s137, %s138
      %p150 = scmp.eq.s32.totalorder %s32, 3
      %p151 = por %p149, %p150
      %p153 = scmp.ne.s32.totalorder %s138, %s152
      %p154 = scmp.eq.s32.totalorder %s32, 0
      %p155 = por %p153, %p154
      %s157 = sadd.s32 %s156, 1
      %p160 = scmp.eq.s32.totalorder %s26, 3
      %p161 = scmp.ne.s32.totalorder %s156, %s158
      %p162 = scmp.eq.s32.totalorder %s26, 0
      %p163 = por %p161, %p162
      %p164 = scmp.ne.s32.totalorder %s156, %s158
      %p165 = scmp.eq.s32.totalorder %s31, 3
      %p166 = por %p164, %p165
      %p167 = scmp.ne.s32.totalorder %s158, %s159
      %p168 = scmp.eq.s32.totalorder %s31, 0
      %p169 = por %p167, %p168
      %p170 = scmp.ne.s32.totalorder %s158, %s159
      %p171 = scmp.eq.s32.totalorder %s32, 3
      %p172 = por %p170, %p171
      %p174 = scmp.ne.s32.totalorder %s159, %s173
      %p175 = scmp.eq.s32.totalorder %s32, 0
      %p176 = por %p174, %p175
      %s178 = sadd.s32 %s177, 1
      %p181 = scmp.eq.s32.totalorder %s26, 3
      %p182 = scmp.ne.s32.totalorder %s177, %s179
      %p183 = scmp.eq.s32.totalorder %s26, 0
      %p184 = por %p182, %p183
      %p185 = scmp.ne.s32.totalorder %s177, %s179
      %p186 = scmp.eq.s32.totalorder %s31, 3
      %p187 = por %p185, %p186
      %p188 = scmp.ne.s32.totalorder %s179, %s180
      %p189 = scmp.eq.s32.totalorder %s31, 0
      %p190 = por %p188, %p189
      %p191 = scmp.ne.s32.totalorder %s179, %s180
      %p192 = scmp.eq.s32.totalorder %s32, 3
      %p193 = por %p191, %p192
      %p195 = scmp.ne.s32.totalorder %s180, %s194
      %p196 = scmp.eq.s32.totalorder %s32, 0
      %p197 = por %p195, %p196
      %s199 = sadd.s32 %s198, 1
      %p202 = scmp.eq.s32.totalorder %s26, 3
      %p203 = scmp.ne.s32.totalorder %s198, %s200
      %p204 = scmp.eq.s32.totalorder %s26, 0
      %p205 = por %p203, %p204
      %p206 = scmp.ne.s32.totalorder %s198, %s200
      %p207 = scmp.eq.s32.totalorder %s31, 3
      %p208 = por %p206, %p207
      %p209 = scmp.ne.s32.totalorder %s200, %s201
      %p210 = scmp.eq.s32.totalorder %s31, 0
      %p211 = por %p209, %p210
      %p212 = scmp.ne.s32.totalorder %s200, %s201
      %p213 = scmp.eq.s32.totalorder %s32, 3
      %p214 = por %p212, %p213
      %p216 = scmp.ne.s32.totalorder %s201, %s215
      %p217 = scmp.eq.s32.totalorder %s32, 0
      %p218 = por %p216, %p217
      %s220 = sadd.s32 %s219, 1
      %p223 = scmp.eq.s32.totalorder %s26, 3
      %p224 = scmp.ne.s32.totalorder %s219, %s221
      %p225 = scmp.eq.s32.totalorder %s26, 0
      %p226 = por %p224, %p225
      %p227 = scmp.ne.s32.totalorder %s219, %s221
      %p228 = scmp.eq.s32.totalorder %s31, 3
      %p229 = por %p227, %p228
      %p230 = scmp.ne.s32.totalorder %s221, %s222
      %p231 = scmp.eq.s32.totalorder %s31, 0
      %p232 = por %p230, %p231
      %p233 = scmp.ne.s32.totalorder %s221, %s222
      %p234 = scmp.eq.s32.totalorder %s32, 3
      %p235 = por %p233, %p234
      %p237 = scmp.ne.s32.totalorder %s222, %s236
      %p238 = scmp.eq.s32.totalorder %s32, 0
      %p239 = por %p237, %p238
      %s241 = sadd.s32 %s240, 1
      %p244 = scmp.eq.s32.totalorder %s26, 3
      %p245 = scmp.ne.s32.totalorder %s240, %s242
      %p246 = scmp.eq.s32.totalorder %s26, 0
      %p247 = por %p245, %p246
      %p248 = scmp.ne.s32.totalorder %s240, %s242
      %p249 = scmp.eq.s32.totalorder %s31, 3
      %p250 = por %p248, %p249
      %p251 = scmp.ne.s32.totalorder %s242, %s243
      %p252 = scmp.eq.s32.totalorder %s31, 0
      %p253 = por %p251, %p252
      %p254 = scmp.ne.s32.totalorder %s242, %s243
      %p255 = scmp.eq.s32.totalorder %s32, 3
      %p256 = por %p254, %p255
      %p258 = scmp.ne.s32.totalorder %s243, %s257
      %p259 = scmp.eq.s32.totalorder %s32, 0
      %p260 = por %p258, %p259
      %s262 = sadd.s32 %s261, 1
      %p265 = scmp.eq.s32.totalorder %s26, 3
      %p266 = scmp.ne.s32.totalorder %s261, %s263
      %p267 = scmp.eq.s32.totalorder %s26, 0
      %p268 = por %p266, %p267
      %p269 = scmp.ne.s32.totalorder %s261, %s263
      %p270 = scmp.eq.s32.totalorder %s31, 3
      %p271 = por %p269, %p270
      %p272 = scmp.ne.s32.totalorder %s263, %s264
      %p273 = scmp.eq.s32.totalorder %s31, 0
      %p274 = por %p272, %p273
      %p275 = scmp.ne.s32.totalorder %s263, %s264
      %p276 = scmp.eq.s32.totalorder %s32, 3
      %p277 = por %p275, %p276
      %p279 = scmp.ne.s32.totalorder %s264, %s278
      %p280 = scmp.eq.s32.totalorder %s32, 0
      %p281 = por %p279, %p280
      %s283 = sadd.s32 %s282, 1
      %p286 = scmp.eq.s32.totalorder %s26, 3
      %p287 = scmp.ne.s32.totalorder %s282, %s284
      %p288 = scmp.eq.s32.totalorder %s26, 0
      %p289 = por %p287, %p288
      %p290 = scmp.ne.s32.totalorder %s282, %s284
      %p291 = scmp.eq.s32.totalorder %s31, 3
      %p292 = por %p290, %p291
      %p293 = scmp.ne.s32.totalorder %s284, %s285
      %p294 = scmp.eq.s32.totalorder %s31, 0
      %p295 = por %p293, %p294
      %p296 = scmp.ne.s32.totalorder %s284, %s285
      %p297 = scmp.eq.s32.totalorder %s32, 3
      %p298 = por %p296, %p297
      %p300 = scmp.ne.s32.totalorder %s285, %s299
      %p301 = scmp.eq.s32.totalorder %s32, 0
      %p302 = por %p300, %p301
      %s304 = sadd.s32 %s303, 1
      %p307 = scmp.eq.s32.totalorder %s26, 3
      %p308 = scmp.ne.s32.totalorder %s303, %s305
      %p309 = scmp.eq.s32.totalorder %s26, 0
      %p310 = por %p308, %p309
      %p311 = scmp.ne.s32.totalorder %s303, %s305
      %p312 = scmp.eq.s32.totalorder %s31, 3
      %p313 = por %p311, %p312
      %p314 = scmp.ne.s32.totalorder %s305, %s306
      %p315 = scmp.eq.s32.totalorder %s31, 0
      %p316 = por %p314, %p315
      %p317 = scmp.ne.s32.totalorder %s305, %s306
      %p318 = scmp.eq.s32.totalorder %s32, 3
      %p319 = por %p317, %p318
      %p321 = scmp.ne.s32.totalorder %s306, %s320
      %p322 = scmp.eq.s32.totalorder %s32, 0
      %p323 = por %p321, %p322
      %s325 = sadd.s32 %s324, 1
      %p328 = scmp.eq.s32.totalorder %s26, 3
      %p329 = scmp.ne.s32.totalorder %s324, %s326
      %p330 = scmp.eq.s32.totalorder %s26, 0
      %p331 = por %p329, %p330
      %p332 = scmp.ne.s32.totalorder %s324, %s326
      %p333 = scmp.eq.s32.totalorder %s31, 3
      %p334 = por %p332, %p333
      %p335 = scmp.ne.s32.totalorder %s326, %s327
      %p336 = scmp.eq.s32.totalorder %s31, 0
      %p337 = por %p335, %p336
      %p338 = scmp.ne.s32.totalorder %s326, %s327
      %p339 = scmp.eq.s32.totalorder %s32, 3
      %p340 = por %p338, %p339
      %p342 = scmp.ne.s32.totalorder %s327, %s341
      %p343 = scmp.eq.s32.totalorder %s32, 0
      %p344 = por %p342, %p343
      %s345 = ssub.s32 %s33, %s45
      %s346 = ssub.s32 %s34, %s41
      %s347 = sor.u32 %s345, %s346
      %p348 = scmp.eq.s32.totalorder %s347, 0
      %s350 = sadd.s32 %s349, 1
      %s351 = scalar_select %p348, %s349, %s350
      %p354 = pneg %p348
      %p355 = scmp.eq.s32.totalorder %s26, 3
      %p356 = por %p354, %p355
      %p357 = scmp.ne.s32.totalorder %s349, %s352
      %p358 = scmp.eq.s32.totalorder %s26, 0
      %p359 = por %p357, %p358
      %p360 = scmp.ne.s32.totalorder %s349, %s352
      %p361 = scmp.eq.s32.totalorder %s31, 3
      %p362 = por %p360, %p361
      %p363 = scmp.ne.s32.totalorder %s352, %s353
      %p364 = scmp.eq.s32.totalorder %s31, 0
      %p365 = por %p363, %p364
      %p366 = scmp.ne.s32.totalorder %s352, %s353
      %p367 = scmp.eq.s32.totalorder %s32, 3
      %p368 = por %p366, %p367
      %p370 = scmp.ne.s32.totalorder %s353, %s369
      %p371 = scmp.eq.s32.totalorder %s32, 0
      %p372 = por %p370, %p371
      %p373 = scmp.le.s32.totalorder 1, %s26
      %p374 = scmp.lt.s32.totalorder %s26, 5
      %p375 = pnand %p373, %p374
      %p376 = pneg %p375
      // Predicated region
      $region9: #{tpu_custom_call.1} parent=5 // pred_check
        _
      $region10: #{tpu_custom_call.1} parent=5 // pred_check_branch
        %378 = sbr.rel (%p375) target = $region12
      $region11: #{tpu_custom_call.1} parent=5 // pred_region
        %s379 = ssub.s32 %s26, 1
        // Predicated region
        $region13: #{tpu_custom_call.1} parent=11 // pred_check
          %p380 = pneg %p85
        $region14: #{tpu_custom_call.1} parent=11 // pred_check_branch
          %382 = sbr.rel (%p380) target = $region16
        $region15: #{tpu_custom_call.1} parent=11 // pred_region
          _
        $region16: #{tpu_custom_call.1} parent=11 // pred_fallthru
          _
        // Predicated region
        $region17: #{tpu_custom_call.1} parent=11 // pred_check
          %p383 = pneg %p106
        $region18: #{tpu_custom_call.1} parent=11 // pred_check_branch
          %385 = sbr.rel (%p383) target = $region20
        $region19: #{tpu_custom_call.1} parent=11 // pred_region
          _
        $region20: #{tpu_custom_call.1} parent=11 // pred_fallthru
          _
        // Predicated region
        $region21: #{tpu_custom_call.1} parent=11 // pred_check
          %p386 = pneg %p127
        $region22: #{tpu_custom_call.1} parent=11 // pred_check_branch
          %388 = sbr.rel (%p386) target = $region24
        $region23: #{tpu_custom_call.1} parent=11 // pred_region
          _
        $region24: #{tpu_custom_call.1} parent=11 // pred_fallthru
          _
        // Predicated region
        $region25: #{tpu_custom_call.1} parent=11 // pred_check
          %p389 = pneg %p148
        $region26: #{tpu_custom_call.1} parent=11 // pred_check_branch
          %391 = sbr.rel (%p389) target = $region28
        $region27: #{tpu_custom_call.1} parent=11 // pred_region
          _
        $region28: #{tpu_custom_call.1} parent=11 // pred_fallthru
          _
        // Predicated region
        $region29: #{tpu_custom_call.1} parent=11 // pred_check
          %p392 = pneg %p169
        $region30: #{tpu_custom_call.1} parent=11 // pred_check_branch
          %394 = sbr.rel (%p392) target = $region32
        $region31: #{tpu_custom_call.1} parent=11 // pred_region
          _
        $region32: #{tpu_custom_call.1} parent=11 // pred_fallthru
          _
        // Predicated region
        $region33: #{tpu_custom_call.1} parent=11 // pred_check
          %p395 = pneg %p190
        $region34: #{tpu_custom_call.1} parent=11 // pred_check_branch
          %397 = sbr.rel (%p395) target = $region36
        $region35: #{tpu_custom_call.1} parent=11 // pred_region
          %s399 = ssub.s32 256, 256
          %400 = vsyncadd [#allocation7], %s399
          %s401 = sshll.u32 [#allocation6], 4
          %s402 = int_to_ptr.vmem [resolvable:$true] %s401
          %407 = dma.hbm_to_vmem [thread:$0]  %s6, 256, %s402, [#allocation7], 64, 64, 4
        $region36: #{tpu_custom_call.1} parent=11 // pred_fallthru
          _
        // Predicated region
        $region37: #{tpu_custom_call.1} parent=11 // pred_check
          %p408 = pneg %p211
        $region38: #{tpu_custom_call.1} parent=11 // pred_check_branch
          %410 = sbr.rel (%p408) target = $region40
        $region39: #{tpu_custom_call.1} parent=11 // pred_region
          %s412 = ssub.s32 16, 16
          %413 = vsyncadd [#allocation10], %s412
          %s415 = sshll.u32 [#allocation9], 4
          %s416 = int_to_ptr.vmem [resolvable:$true] %s415
          %418 = dma.hbm_to_vmem [thread:$0]  %s7, 16, %s416, [#allocation10]
        $region40: #{tpu_custom_call.1} parent=11 // pred_fallthru
          _
        // Predicated region
        $region41: #{tpu_custom_call.1} parent=11 // pred_check
          %p419 = pneg %p232
        $region42: #{tpu_custom_call.1} parent=11 // pred_check_branch
          %421 = sbr.rel (%p419) target = $region44
        $region43: #{tpu_custom_call.1} parent=11 // pred_region
          %s423 = ssub.s32 16, 16
          %424 = vsyncadd [#allocation10], %s423
          %s426 = sshll.u32 [#allocation11], 4
          %s427 = int_to_ptr.vmem [resolvable:$true] %s426
          %429 = dma.hbm_to_vmem [thread:$0]  %s8, 16, %s427, [#allocation10]
        $region44: #{tpu_custom_call.1} parent=11 // pred_fallthru
          _
        // Predicated region
        $region45: #{tpu_custom_call.1} parent=11 // pred_check
          %p430 = pneg %p253
        $region46: #{tpu_custom_call.1} parent=11 // pred_check_branch
          %432 = sbr.rel (%p430) target = $region48
        $region47: #{tpu_custom_call.1} parent=11 // pred_region
          %s434 = ssub.s32 16, 16
          %435 = vsyncadd [#allocation13], %s434
          %s437 = sshll.u32 [#allocation12], 4
          %s438 = int_to_ptr.vmem [resolvable:$true] %s437
          %440 = dma.hbm_to_vmem [thread:$0]  %s9, 16, %s438, [#allocation13]
        $region48: #{tpu_custom_call.1} parent=11 // pred_fallthru
          _
        // Predicated region
        $region49: #{tpu_custom_call.1} parent=11 // pred_check
          %p441 = pneg %p274
        $region50: #{tpu_custom_call.1} parent=11 // pred_check_branch
          %443 = sbr.rel (%p441) target = $region52
        $region51: #{tpu_custom_call.1} parent=11 // pred_region
          _
        $region52: #{tpu_custom_call.1} parent=11 // pred_fallthru
          _
        // Predicated region
        $region53: #{tpu_custom_call.1} parent=11 // pred_check
          %p444 = pneg %p295
        $region54: #{tpu_custom_call.1} parent=11 // pred_check_branch
          %446 = sbr.rel (%p444) target = $region56
        $region55: #{tpu_custom_call.1} parent=11 // pred_region
          _
        $region56: #{tpu_custom_call.1} parent=11 // pred_fallthru
          _
        // Predicated region
        $region57: #{tpu_custom_call.1} parent=11 // pred_check
          %p447 = pneg %p316
        $region58: #{tpu_custom_call.1} parent=11 // pred_check_branch
          %449 = sbr.rel (%p447) target = $region60
        $region59: #{tpu_custom_call.1} parent=11 // pred_region
          _
        $region60: #{tpu_custom_call.1} parent=11 // pred_fallthru
          _
        // Predicated region
        $region61: #{tpu_custom_call.1} parent=11 // pred_check
          %p450 = pneg %p337
        $region62: #{tpu_custom_call.1} parent=11 // pred_check_branch
          %452 = sbr.rel (%p450) target = $region64
        $region63: #{tpu_custom_call.1} parent=11 // pred_region
          _
        $region64: #{tpu_custom_call.1} parent=11 // pred_fallthru
          _
      $region12: #{tpu_custom_call.1} parent=5 // pred_fallthru
        _
      %p453 = scmp.lt.s32.totalorder %s26, 4
      // Predicated region
      $region65: #{tpu_custom_call.1} parent=5 // pred_check
        %p454 = pneg %p453
      $region66: #{tpu_custom_call.1} parent=5 // pred_check_branch
        %456 = sbr.rel (%p454) target = $region68
      $region67: #{tpu_custom_call.1} parent=5 // pred_region
        // Predicated region
        $region69: #{tpu_custom_call.1} parent=67 // pred_check
          %p457 = pneg %p58
        $region70: #{tpu_custom_call.1} parent=67 // pred_check_branch
          %459 = sbr.rel (%p457) target = $region72
        $region71: #{tpu_custom_call.1} parent=67 // pred_region
          %p460 = scmp.lt.s32.totalorder %s33, 1
          %s461 = scalar_select %p460, %s33, 1
          %s462 = smul.addr %s461, 2
          %s463 = smul.addr %s462, 8
          %s464 = scalar_lea.vmem %s0, %s463
        $region72: #{tpu_custom_call.1} parent=67 // pred_fallthru
          _
      $region68: #{tpu_custom_call.1} parent=5 // pred_fallthru
        _
      %p465 = scmp.le.s32.totalorder 1, %s26
      %p466 = scmp.lt.s32.totalorder %s26, 5
      %p467 = pnand %p465, %p466
      %p468 = pneg %p467
      // Predicated region
      $region73: #{tpu_custom_call.1} parent=5 // pred_check
        _
      $region74: #{tpu_custom_call.1} parent=5 // pred_check_branch
        %470 = sbr.rel (%p467) target = $region76
      $region75: #{tpu_custom_call.1} parent=5 // pred_region
        %s471 = ssub.s32 %s26, 1
        // Predicated region
        $region77: #{tpu_custom_call.1} parent=75 // pred_check
          %p472 = pneg %p190
        $region78: #{tpu_custom_call.1} parent=75 // pred_check_branch
          %474 = sbr.rel (%p472) target = $region80
        $region79: #{tpu_custom_call.1} parent=75 // pred_region
          %475 = dma.done [#allocation7], 256
        $region80: #{tpu_custom_call.1} parent=75 // pred_fallthru
          _
        // Predicated region
        $region81: #{tpu_custom_call.1} parent=75 // pred_check
          %p476 = pneg %p211
        $region82: #{tpu_custom_call.1} parent=75 // pred_check_branch
          %478 = sbr.rel (%p476) target = $region84
        $region83: #{tpu_custom_call.1} parent=75 // pred_region
          %479 = dma.done [#allocation10], 16
        $region84: #{tpu_custom_call.1} parent=75 // pred_fallthru
          _
        // Predicated region
        $region85: #{tpu_custom_call.1} parent=75 // pred_check
          %p480 = pneg %p232
        $region86: #{tpu_custom_call.1} parent=75 // pred_check_branch
          %482 = sbr.rel (%p480) target = $region88
        $region87: #{tpu_custom_call.1} parent=75 // pred_region
          %483 = dma.done [#allocation10], 16
        $region88: #{tpu_custom_call.1} parent=75 // pred_fallthru
          _
        // Predicated region
        $region89: #{tpu_custom_call.1} parent=75 // pred_check
          %p484 = pneg %p253
        $region90: #{tpu_custom_call.1} parent=75 // pred_check_branch
          %486 = sbr.rel (%p484) target = $region92
        $region91: #{tpu_custom_call.1} parent=75 // pred_region
          %487 = dma.done [#allocation13], 16
        $region92: #{tpu_custom_call.1} parent=75 // pred_fallthru
          _
        %p488 = scmp.lt.s32.totalorder %s35, 1
        %s489 = scalar_select %p488, %s35, 1
        %s490 = smul.addr %s489, 2
        %s491 = smul.addr %s490, 8
        %s492 = scalar_lea.vmem %s0, %s491
        %p493 = pneg %p64
        %p494 = pneg %p61
        %p495 = pneg %p85
        %p496 = pneg %p82
        %p497 = pneg %p106
        %p498 = pneg %p103
        %p499 = pneg %p127
        %p500 = pneg %p124
        %p501 = pneg %p148
        %p502 = pneg %p145
        %p503 = pneg %p169
        %p504 = pneg %p166
        %p505 = pneg %p190
        %p506 = pneg %p187
        %p507 = pneg %p211
        %p508 = pneg %p208
        %p509 = pneg %p232
        %p510 = pneg %p229
        %p511 = pneg %p253
        %p512 = pneg %p250
        %p513 = pneg %p274
        %p514 = pneg %p271
        %p515 = pneg %p295
        %p516 = pneg %p292
        %p517 = pneg %p316
        %p518 = pneg %p313
        %p519 = pneg %p337
        %p520 = pneg %p334
        %p521 = pneg %p365
        %p522 = pneg %p362
        %s523 = sand.u32 %s352, 1
        %s524 = scalar_lea.sflag [#allocation8], %s523
        %s525 = sand.u32 %s352, 1
        %s526 = smul.addr %s525, 8
        %s527 = scalar_lea.vmem [#allocation14], %s526
        %p528 = scmp.lt.s32.totalorder %s35, 1
        %s529 = scalar_select %p528, %s35, 1
        %s530 = smul.addr %s529, 2
        %s531 = smul.addr %s530, 8
        %s532 = scalar_lea.vmem %s0, %s531
        %p534 = scmp.eq.s32.totalorder %s36, 0
        // Predicated region
        $region93: #{tpu_custom_call.1} parent=75 // pred_check
          %p535 = pneg %p534
        $region94: #{tpu_custom_call.1} parent=75 // pred_check_branch
          %537 = sbr.rel (%p535) target = $region96
        $region95: #{tpu_custom_call.1} parent=75 // pred_region
          %v538 = vld [vmem:[%s532] sm:$0xff]
          %v539 = vld [vmem:[%s532 + $0x8] sm:$0xff]
          %v540 = vld [vmem:[%s1] sm:$0x1]
          %v541 = vld [vmem:[%s2] sm:$0x1]
          %vm542 = vcmask 261120
          %v543 = vsel %vm542, %v538, 0.0
          %544 = vadd.xlane.f32.xlu0 %v543
          %v545 = vpop.xlane.xlu0 %544
          %v546 = vsel %vm542, %v539, 0.0
          %547 = vadd.xlane.f32.xlu0 %v546
          %v548 = vpop.xlane.xlu0 %547
          %v549 = vrcp.pop 32.0
          %v550 = vmul.f32 %v545, %v549
          %v551 = vmul.f32 %v548, %v549
          %v552 = vsub.f32 %v538, %v550
          %v553 = vsub.f32 %v539, %v551
          %v554 = vmul.f32 %v552, %v552
          %v555 = vmul.f32 %v553, %v553
          %v556 = vsel %vm542, %v554, 0.0
          %557 = vadd.xlane.f32.xlu0 %v556
          %v558 = vpop.xlane.xlu0 %557
          %v559 = vsel %vm542, %v555, 0.0
          %560 = vadd.xlane.f32.xlu0 %v559
          %v561 = vpop.xlane.xlu0 %560
          %v562 = vmul.f32 %v558, %v549
          %v563 = vmul.f32 %v561, %v549
          %v564 = vadd.f32 %v562, 1e-05
          %v565 = vadd.f32 %v563, 1e-05
          %v566 = vrsqrt.pop %v564
          %v567 = vrsqrt.pop %v565
          %v568 = vmul.f32 %v552, %v566
          %v569 = vmul.f32 %v553, %v567
          %v571 = vlaneseq
          %v572 = vshrl.u32 %v571, 7
          %v573 = vsub.s32 0, %v572
          %v574 = vrot.slane %v540, %v573
          %v576 = vmul.f32 %v568, %v574
          %v577 = vmul.f32 %v569, %v574
          %v579 = vlaneseq
          %v580 = vshrl.u32 %v579, 7
          %v581 = vsub.s32 0, %v580
          %v582 = vrot.slane %v541, %v581
          %v584 = vadd.f32 %v576, %v582
          %v585 = vadd.f32 %v577, %v582
          %v586 = vpack.c.bf16 %v585, %v584
          %v587 = vld [vmem:[%s3] sm:$0xf]
          %v588 = vld [vmem:[%s3 + $0x4] sm:$0xf]
          %v589 = vld [vmem:[%s3 + $0x8] sm:$0xf]
          %v590 = vld [vmem:[%s3 + $0xc] sm:$0xf]
          %v595 = vunpack.c.l.b16 %v587
          %v596 = vunpack.c.l.b16 %v588
          %v597 = vunpack.c.l.b16 %v589
          %v598 = vunpack.c.l.b16 %v590
          %v599 = vpack.c.b16 %v596, %v595
          %v600 = vpack.c.b16 %v598, %v597
          %v604 = vsel %vm542, %v586, 0
          %606 = vmatprep.subr.bf16.mxu0 0
          %607 = vmatpush1.bf16.msra.mxu0 %v599
          %608 = vmatprep.subr.bf16.mxu0 0
          %609 = vmatpush1.bf16.msra.mxu0 %v600
          %610 = vmatprep.subr.bf16.mxu0 0
          %611 = vmatpush1.bf16.msra.mxu0 0
          %612 = vmatprep.subr.bf16.mxu0 0
          %613 = vmatpush1.bf16.msra.mxu0 0
          %614 = vmatprep.subr.bf16.mxu0 0
          %615 = vmatpush1.bf16.msra.mxu0 0
          %616 = vmatprep.subr.bf16.mxu0 0
          %617 = vmatpush1.bf16.msra.mxu0 0
          %618 = vmatprep.subr.bf16.mxu0 0
          %619 = vmatpush1.bf16.msra.mxu0 0
          %620 = vmatprep.subr.bf16.mxu0 0
          %621 = vmatpush1.bf16.msra.mxu0 0
          %622 = vmatprep.subr.bf16.mxu0 0
          %623 = vmatpush1.bf16.msra.mxu0 0
          %624 = vmatprep.subr.bf16.mxu0 0
          %625 = vmatpush1.bf16.msra.mxu0 0
          %626 = vmatprep.subr.bf16.mxu0 0
          %627 = vmatpush1.bf16.msra.mxu0 0
          %628 = vmatprep.subr.bf16.mxu0 0
          %629 = vmatpush1.bf16.msra.mxu0 0
          %630 = vmatprep.subr.bf16.mxu0 0
          %631 = vmatpush1.bf16.msra.mxu0 0
          %632 = vmatprep.subr.bf16.mxu0 0
          %633 = vmatpush1.bf16.msra.mxu0 0
          %634 = vmatprep.subr.bf16.mxu0 0
          %635 = vmatpush1.bf16.msra.mxu0 0
          %636 = vmatprep.subr.bf16.mxu0 0
          %637 = vmatpush1.bf16.msra.mxu0 0
          %638 = vmatprep.mubr.bf16.mxu0 0
          %639 = vmatmul.mubr.bf16.gmra.mrb[0].mxu0 %v604
          %v640 = vpop.f32.mrb[0].mxu0
          %v641 = vadd.f32 0.0, %v640
          %v642 = vpop.f32.mrb[0].mxu0
          %v643 = vpop.f32.mrb[0].mxu0
          %v644 = vadd.f32 0.0, %v643
          %v645 = vpop.f32.mrb[0].mxu0
          %646 = vdwg.mxu0
          %v647 = vmul.f32 %v641, 0.35355338
          %v648 = vmul.f32 %v644, 0.35355338
          %v649 = vpack.c.bf16 %v647, %v647
          %vm650 = vcmask 257024
          %651 = vst.msk [vmem:[#allocation2] sm:$0xf] %vm650, %v649
          %v652 = vpack.c.bf16 %v648, %v648
          %s653 = scalar_lea.vmem [#allocation2], 4
          %654 = vst.msk [vmem:[%s653] sm:$0xf] %vm650, %v652
          %v655 = vld [vmem:[%s4] sm:$0xf]
          %v656 = vld [vmem:[%s4 + $0x4] sm:$0xf]
          %v657 = vld [vmem:[%s4 + $0x8] sm:$0xf]
          %v658 = vld [vmem:[%s4 + $0xc] sm:$0xf]
          %v663 = vunpack.c.l.b16 %v655
          %v664 = vunpack.c.l.b16 %v656
          %v665 = vunpack.c.l.b16 %v657
          %v666 = vunpack.c.l.b16 %v658
          %v667 = vpack.c.b16 %v664, %v663
          %v668 = vpack.c.b16 %v666, %v665
          %671 = vmatprep.subr.bf16.mxu0 0
          %672 = vmatpush1.bf16.msra.mxu0 %v667
          %673 = vmatprep.subr.bf16.mxu0 0
          %674 = vmatpush1.bf16.msra.mxu0 %v668
          %675 = vmatprep.subr.bf16.mxu0 0
          %676 = vmatpush1.bf16.msra.mxu0 0
          %677 = vmatprep.subr.bf16.mxu0 0
          %678 = vmatpush1.bf16.msra.mxu0 0
          %679 = vmatprep.subr.bf16.mxu0 0
          %680 = vmatpush1.bf16.msra.mxu0 0
          %681 = vmatprep.subr.bf16.mxu0 0
          %682 = vmatpush1.bf16.msra.mxu0 0
          %683 = vmatprep.subr.bf16.mxu0 0
          %684 = vmatpush1.bf16.msra.mxu0 0
          %685 = vmatprep.subr.bf16.mxu0 0
          %686 = vmatpush1.bf16.msra.mxu0 0
          %687 = vmatprep.subr.bf16.mxu0 0
          %688 = vmatpush1.bf16.msra.mxu0 0
          %689 = vmatprep.subr.bf16.mxu0 0
          %690 = vmatpush1.bf16.msra.mxu0 0
          %691 = vmatprep.subr.bf16.mxu0 0
          %692 = vmatpush1.bf16.msra.mxu0 0
          %693 = vmatprep.subr.bf16.mxu0 0
          %694 = vmatpush1.bf16.msra.mxu0 0
          %695 = vmatprep.subr.bf16.mxu0 0
          %696 = vmatpush1.bf16.msra.mxu0 0
          %697 = vmatprep.subr.bf16.mxu0 0
          %698 = vmatpush1.bf16.msra.mxu0 0
          %699 = vmatprep.subr.bf16.mxu0 0
          %700 = vmatpush1.bf16.msra.mxu0 0
          %701 = vmatprep.subr.bf16.mxu0 0
          %702 = vmatpush1.bf16.msra.mxu0 0
          %703 = vmatprep.mubr.bf16.mxu0 0
          %704 = vmatmul.mubr.bf16.gmra.mrb[0].mxu0 %v604
          %v705 = vpop.f32.mrb[0].mxu0
          %v706 = vadd.f32 0.0, %v705
          %v707 = vpop.f32.mrb[0].mxu0
          %v708 = vpop.f32.mrb[0].mxu0
          %v709 = vadd.f32 0.0, %v708
          %v710 = vpop.f32.mrb[0].mxu0
          %711 = vdwg.mxu0
          %v712 = vpack.c.bf16 %v709, %v706
          %713 = vst.msk [vmem:[#allocation3] sm:$0xff] %vm542, %v712
          %v714 = vld [vmem:[%s5] sm:$0xf]
          %v715 = vld [vmem:[%s5 + $0x4] sm:$0xf]
          %v716 = vld [vmem:[%s5 + $0x8] sm:$0xf]
          %v717 = vld [vmem:[%s5 + $0xc] sm:$0xf]
          %v722 = vunpack.c.l.b16 %v714
          %v723 = vunpack.c.l.b16 %v715
          %v724 = vunpack.c.l.b16 %v716
          %v725 = vunpack.c.l.b16 %v717
          %v726 = vpack.c.b16 %v723, %v722
          %v727 = vpack.c.b16 %v725, %v724
          %730 = vmatprep.subr.bf16.mxu0 0
          %731 = vmatpush1.bf16.msra.mxu0 %v726
          %732 = vmatprep.subr.bf16.mxu0 0
          %733 = vmatpush1.bf16.msra.mxu0 %v727
          %734 = vmatprep.subr.bf16.mxu0 0
          %735 = vmatpush1.bf16.msra.mxu0 0
          %736 = vmatprep.subr.bf16.mxu0 0
          %737 = vmatpush1.bf16.msra.mxu0 0
          %738 = vmatprep.subr.bf16.mxu0 0
          %739 = vmatpush1.bf16.msra.mxu0 0
          %740 = vmatprep.subr.bf16.mxu0 0
          %741 = vmatpush1.bf16.msra.mxu0 0
          %742 = vmatprep.subr.bf16.mxu0 0
          %743 = vmatpush1.bf16.msra.mxu0 0
          %744 = vmatprep.subr.bf16.mxu0 0
          %745 = vmatpush1.bf16.msra.mxu0 0
          %746 = vmatprep.subr.bf16.mxu0 0
          %747 = vmatpush1.bf16.msra.mxu0 0
          %748 = vmatprep.subr.bf16.mxu0 0
          %749 = vmatpush1.bf16.msra.mxu0 0
          %750 = vmatprep.subr.bf16.mxu0 0
          %751 = vmatpush1.bf16.msra.mxu0 0
          %752 = vmatprep.subr.bf16.mxu0 0
          %753 = vmatpush1.bf16.msra.mxu0 0
          %754 = vmatprep.subr.bf16.mxu0 0
          %755 = vmatpush1.bf16.msra.mxu0 0
          %756 = vmatprep.subr.bf16.mxu0 0
          %757 = vmatpush1.bf16.msra.mxu0 0
          %758 = vmatprep.subr.bf16.mxu0 0
          %759 = vmatpush1.bf16.msra.mxu0 0
          %760 = vmatprep.subr.bf16.mxu0 0
          %761 = vmatpush1.bf16.msra.mxu0 0
          %762 = vmatprep.mubr.bf16.mxu0 0
          %763 = vmatmul.mubr.bf16.gmra.mrb[0].mxu0 %v604
          %v764 = vpop.f32.mrb[0].mxu0
          %v765 = vadd.f32 0.0, %v764
          %v766 = vpop.f32.mrb[0].mxu0
          %v767 = vpop.f32.mrb[0].mxu0
          %v768 = vadd.f32 0.0, %v767
          %v769 = vpop.f32.mrb[0].mxu0
          %770 = vdwg.mxu0
          %v771 = vpack.c.bf16 %v768, %v765
          %772 = vst.msk [vmem:[#allocation4] sm:$0xff] %vm542, %v771
        $region96: #{tpu_custom_call.1} parent=75 // pred_fallthru
          _
        %s773 = smul.u32 %s36, 8
        %s774 = scalar_lea.vmem %s532, %s773
        %v775 = vld [vmem:[%s774] sm:$0xff]
        %s776 = smul.addr %s36, 4
        %s777 = scalar_lea.vmem [#allocation2], %s776
        %v778 = vld [vmem:[%s777] sm:$0xf]
        %v779 = vld [vmem:[#allocation3] sm:$0xff]
        %v780 = vld [vmem:[#allocation4] sm:$0xff]
        %vm781 = vcmask 64512
        %v783 = vsel %vm781, %v778, 0
        %v786 = vsel %vm781, %v779, 0
        %788 = vmatprep.subr.bf16.mxu0 0
        %789 = vmatpush1.bf16.xpose.msra.mxu0 %v786
        %790 = vmatprep.subr.bf16.mxu0 0
        %791 = vmatpush1.bf16.xpose.msra.mxu0 0
        %792 = vmatprep.subr.bf16.mxu0 0
        %793 = vmatpush1.bf16.xpose.msra.mxu0 0
        %794 = vmatprep.subr.bf16.mxu0 0
        %795 = vmatpush1.bf16.xpose.msra.mxu0 0
        %796 = vmatprep.subr.bf16.mxu0 0
        %797 = vmatpush1.bf16.xpose.msra.mxu0 0
        %798 = vmatprep.subr.bf16.mxu0 0
        %799 = vmatpush1.bf16.xpose.msra.mxu0 0
        %800 = vmatprep.subr.bf16.mxu0 0
        %801 = vmatpush1.bf16.xpose.msra.mxu0 0
        %802 = vmatprep.subr.bf16.mxu0 0
        %803 = vmatpush1.bf16.xpose.msra.mxu0 0
        %804 = vmatprep.subr.bf16.mxu0 0
        %805 = vmatpush1.bf16.xpose.msra.mxu0 0
        %806 = vmatprep.subr.bf16.mxu0 0
        %807 = vmatpush1.bf16.xpose.msra.mxu0 0
        %808 = vmatprep.subr.bf16.mxu0 0
        %809 = vmatpush1.bf16.xpose.msra.mxu0 0
        %810 = vmatprep.subr.bf16.mxu0 0
        %811 = vmatpush1.bf16.xpose.msra.mxu0 0
        %812 = vmatprep.subr.bf16.mxu0 0
        %813 = vmatpush1.bf16.xpose.msra.mxu0 0
        %814 = vmatprep.subr.bf16.mxu0 0
        %815 = vmatpush1.bf16.xpose.msra.mxu0 0
        %816 = vmatprep.subr.bf16.mxu0 0
        %817 = vmatpush1.bf16.xpose.msra.mxu0 0
        %818 = vmatprep.subr.bf16.mxu0 0
        %819 = vmatpush1.bf16.xpose.msra.mxu0 0
        %820 = vmatprep.mubr.bf16.mxu0 0
        %821 = vmatmul.mubr.bf16.gmra.mrb[0].mxu0 %v783
        %v822 = vpop.f32.mrb[0].mxu0
        %v823 = vadd.f32 0.0, %v822
        %v824 = vpop.f32.mrb[0].mxu0
        %v825 = vpop.f32.mrb[0].mxu0
        %v826 = vpop.f32.mrb[0].mxu0
        %827 = vdwg.mxu0
        %vm828 = vcmask 130048
        %v829 = vsel %vm828, %v823, -inf
        %830 = vmax.xlane.f32.xlu0 %v829
        %v831 = vpop.xlane.xlu0 %830
        %v832 = vsub.f32 %v823, %v831
        %v833 = vmul.f32 %v832, 1.442695
        %v834 = vpow.pop %v833
        %v835 = vsel %vm828, %v834, 0.0
        %836 = vadd.xlane.f32.xlu0 %v835
        %v837 = vpop.xlane.xlu0 %836
        %v838 = vrcp.pop %v837
        %v839 = vmul.f32 %v834, %v838
        %v840 = vpack.c.bf16 %v839, %v839
        %v842 = vsel %vm828, %v840, 0
        %844 = vmatprep.subr.bf16.mxu0 0
        %845 = vmatpush1.bf16.msra.mxu0 %v780
        %846 = vmatprep.subr.bf16.mxu0 0
        %847 = vmatpush1.bf16.msra.mxu0 0
        %848 = vmatprep.subr.bf16.mxu0 0
        %849 = vmatpush1.bf16.msra.mxu0 0
        %850 = vmatprep.subr.bf16.mxu0 0
        %851 = vmatpush1.bf16.msra.mxu0 0
        %852 = vmatprep.subr.bf16.mxu0 0
        %853 = vmatpush1.bf16.msra.mxu0 0
        %854 = vmatprep.subr.bf16.mxu0 0
        %855 = vmatpush1.bf16.msra.mxu0 0
        %856 = vmatprep.subr.bf16.mxu0 0
        %857 = vmatpush1.bf16.msra.mxu0 0
        %858 = vmatprep.subr.bf16.mxu0 0
        %859 = vmatpush1.bf16.msra.mxu0 0
        %860 = vmatprep.subr.bf16.mxu0 0
        %861 = vmatpush1.bf16.msra.mxu0 0
        %862 = vmatprep.subr.bf16.mxu0 0
        %863 = vmatpush1.bf16.msra.mxu0 0
        %864 = vmatprep.subr.bf16.mxu0 0
        %865 = vmatpush1.bf16.msra.mxu0 0
        %866 = vmatprep.subr.bf16.mxu0 0
        %867 = vmatpush1.bf16.msra.mxu0 0
        %868 = vmatprep.subr.bf16.mxu0 0
        %869 = vmatpush1.bf16.msra.mxu0 0
        %870 = vmatprep.subr.bf16.mxu0 0
        %871 = vmatpush1.bf16.msra.mxu0 0
        %872 = vmatprep.subr.bf16.mxu0 0
        %873 = vmatpush1.bf16.msra.mxu0 0
        %874 = vmatprep.subr.bf16.mxu0 0
        %875 = vmatpush1.bf16.msra.mxu0 0
        %876 = vmatprep.mubr.bf16.mxu0 0
        %877 = vmatmul.mubr.bf16.gmra.mrb[0].mxu0 %v842
        %v878 = vpop.f32.mrb[0].mxu0
        %v879 = vadd.f32 0.0, %v878
        %v880 = vpop.f32.mrb[0].mxu0
        %v881 = vpop.f32.mrb[0].mxu0
        %v882 = vpop.f32.mrb[0].mxu0
        %883 = vdwg.mxu0
        %v884 = vpack.c.bf16 %v879, %v879
        %vm885 = vcmask 60416
        %886 = vst.msk [vmem:[#allocation5] sm:$0xf] %vm885, %v884
        %v888 = vunpack.c.l.b16 %v778
        %v889 = vpack.c.b16 %v888, %v888
        %890 = vrot.lane.b32.xlu0 %v889, 120
        %v891 = vpop.permute.xlu0 %890
        %893 = vrot.lane.b32.xlu0 %v779, 120
        %v894 = vpop.permute.xlu0 %893
        %v896 = vsel %vm781, %v891, 0
        %v899 = vsel %vm781, %v894, 0
        %901 = vmatprep.subr.bf16.mxu0 0
        %902 = vmatpush1.bf16.xpose.msra.mxu0 %v899
        %903 = vmatprep.subr.bf16.mxu0 0
        %904 = vmatpush1.bf16.xpose.msra.mxu0 0
        %905 = vmatprep.subr.bf16.mxu0 0
        %906 = vmatpush1.bf16.xpose.msra.mxu0 0
        %907 = vmatprep.subr.bf16.mxu0 0
        %908 = vmatpush1.bf16.xpose.msra.mxu0 0
        %909 = vmatprep.subr.bf16.mxu0 0
        %910 = vmatpush1.bf16.xpose.msra.mxu0 0
        %911 = vmatprep.subr.bf16.mxu0 0
        %912 = vmatpush1.bf16.xpose.msra.mxu0 0
        %913 = vmatprep.subr.bf16.mxu0 0
        %914 = vmatpush1.bf16.xpose.msra.mxu0 0
        %915 = vmatprep.subr.bf16.mxu0 0
        %916 = vmatpush1.bf16.xpose.msra.mxu0 0
        %917 = vmatprep.subr.bf16.mxu0 0
        %918 = vmatpush1.bf16.xpose.msra.mxu0 0
        %919 = vmatprep.subr.bf16.mxu0 0
        %920 = vmatpush1.bf16.xpose.msra.mxu0 0
        %921 = vmatprep.subr.bf16.mxu0 0
        %922 = vmatpush1.bf16.xpose.msra.mxu0 0
        %923 = vmatprep.subr.bf16.mxu0 0
        %924 = vmatpush1.bf16.xpose.msra.mxu0 0
        %925 = vmatprep.subr.bf16.mxu0 0
        %926 = vmatpush1.bf16.xpose.msra.mxu0 0
        %927 = vmatprep.subr.bf16.mxu0 0
        %928 = vmatpush1.bf16.xpose.msra.mxu0 0
        %929 = vmatprep.subr.bf16.mxu0 0
        %930 = vmatpush1.bf16.xpose.msra.mxu0 0
        %931 = vmatprep.subr.bf16.mxu0 0
        %932 = vmatpush1.bf16.xpose.msra.mxu0 0
        %933 = vmatprep.mubr.bf16.mxu0 0
        %934 = vmatmul.mubr.bf16.gmra.mrb[0].mxu0 %v896
        %v935 = vpop.f32.mrb[0].mxu0
        %v936 = vadd.f32 0.0, %v935
        %v937 = vpop.f32.mrb[0].mxu0
        %v938 = vpop.f32.mrb[0].mxu0
        %v939 = vpop.f32.mrb[0].mxu0
        %940 = vdwg.mxu0
        %v941 = vsel %vm828, %v936, -inf
        %942 = vmax.xlane.f32.xlu0 %v941
        %v943 = vpop.xlane.xlu0 %942
        %v944 = vsub.f32 %v936, %v943
        %v945 = vmul.f32 %v944, 1.442695
        %v946 = vpow.pop %v945
        %v947 = vsel %vm828, %v946, 0.0
        %948 = vadd.xlane.f32.xlu0 %v947
        %v949 = vpop.xlane.xlu0 %948
        %v950 = vrcp.pop %v949
        %v951 = vmul.f32 %v946, %v950
        %v952 = vpack.c.bf16 %v951, %v951
        %954 = vrot.lane.b32.xlu0 %v780, 120
        %v955 = vpop.permute.xlu0 %954
        %v958 = vsel %vm828, %v952, 0
        %960 = vmatprep.subr.bf16.mxu0 0
        %961 = vmatpush1.bf16.msra.mxu0 %v955
        %962 = vmatprep.subr.bf16.mxu0 0
        %963 = vmatpush1.bf16.msra.mxu0 0
        %964 = vmatprep.subr.bf16.mxu0 0
        %965 = vmatpush1.bf16.msra.mxu0 0
        %966 = vmatprep.subr.bf16.mxu0 0
        %967 = vmatpush1.bf16.msra.mxu0 0
        %968 = vmatprep.subr.bf16.mxu0 0
        %969 = vmatpush1.bf16.msra.mxu0 0
        %970 = vmatprep.subr.bf16.mxu0 0
        %971 = vmatpush1.bf16.msra.mxu0 0
        %972 = vmatprep.subr.bf16.mxu0 0
        %973 = vmatpush1.bf16.msra.mxu0 0
        %974 = vmatprep.subr.bf16.mxu0 0
        %975 = vmatpush1.bf16.msra.mxu0 0
        %976 = vmatprep.subr.bf16.mxu0 0
        %977 = vmatpush1.bf16.msra.mxu0 0
        %978 = vmatprep.subr.bf16.mxu0 0
        %979 = vmatpush1.bf16.msra.mxu0 0
        %980 = vmatprep.subr.bf16.mxu0 0
        %981 = vmatpush1.bf16.msra.mxu0 0
        %982 = vmatprep.subr.bf16.mxu0 0
        %983 = vmatpush1.bf16.msra.mxu0 0
        %984 = vmatprep.subr.bf16.mxu0 0
        %985 = vmatpush1.bf16.msra.mxu0 0
        %986 = vmatprep.subr.bf16.mxu0 0
        %987 = vmatpush1.bf16.msra.mxu0 0
        %988 = vmatprep.subr.bf16.mxu0 0
        %989 = vmatpush1.bf16.msra.mxu0 0
        %990 = vmatprep.subr.bf16.mxu0 0
        %991 = vmatpush1.bf16.msra.mxu0 0
        %992 = vmatprep.mubr.bf16.mxu0 0
        %993 = vmatmul.mubr.bf16.gmra.mrb[0].mxu0 %v958
        %v994 = vpop.f32.mrb[0].mxu0
        %v995 = vadd.f32 0.0, %v994
        %v996 = vpop.f32.mrb[0].mxu0
        %v997 = vpop.f32.mrb[0].mxu0
        %v998 = vpop.f32.mrb[0].mxu0
        %999 = vdwg.mxu0
        %v1000 = vpack.c.bf16 %v995, %v995
        %v1002 = vunpack.c.l.b16 %v1000
        %v1003 = vpack.c.b16 %v1002, %v1002
        %1004 = vrot.lane.b32.xlu0 %v1003, 8
        %v1005 = vpop.permute.xlu0 %1004
        %vm1007 = vcmask 126016
        %1008 = vst.msk [vmem:[#allocation5] sm:$0xf] %vm1007, %v1005
        %1009 = vrot.lane.b32.xlu0 %v889, 112
        %v1010 = vpop.permute.xlu0 %1009
        %1011 = vrot.lane.b32.xlu0 %v779, 112
        %v1012 = vpop.permute.xlu0 %1011
        %v1014 = vsel %vm781, %v1010, 0
        %v1017 = vsel %vm781, %v1012, 0
        %1019 = vmatprep.subr.bf16.mxu0 0
        %1020 = vmatpush1.bf16.xpose.msra.mxu0 %v1017
        %1021 = vmatprep.subr.bf16.mxu0 0
        %1022 = vmatpush1.bf16.xpose.msra.mxu0 0
        %1023 = vmatprep.subr.bf16.mxu0 0
        %1024 = vmatpush1.bf16.xpose.msra.mxu0 0
        %1025 = vmatprep.subr.bf16.mxu0 0
        %1026 = vmatpush1.bf16.xpose.msra.mxu0 0
        %1027 = vmatprep.subr.bf16.mxu0 0
        %1028 = vmatpush1.bf16.xpose.msra.mxu0 0
        %1029 = vmatprep.subr.bf16.mxu0 0
        %1030 = vmatpush1.bf16.xpose.msra.mxu0 0
        %1031 = vmatprep.subr.bf16.mxu0 0
        %1032 = vmatpush1.bf16.xpose.msra.mxu0 0
        %1033 = vmatprep.subr.bf16.mxu0 0
        %1034 = vmatpush1.bf16.xpose.msra.mxu0 0
        %1035 = vmatprep.subr.bf16.mxu0 0
        %1036 = vmatpush1.bf16.xpose.msra.mxu0 0
        %1037 = vmatprep.subr.bf16.mxu0 0
        %1038 = vmatpush1.bf16.xpose.msra.mxu0 0
        %1039 = vmatprep.subr.bf16.mxu0 0
        %1040 = vmatpush1.bf16.xpose.msra.mxu0 0
        %1041 = vmatprep.subr.bf16.mxu0 0
        %1042 = vmatpush1.bf16.xpose.msra.mxu0 0
        %1043 = vmatprep.subr.bf16.mxu0 0
        %1044 = vmatpush1.bf16.xpose.msra.mxu0 0
        %1045 = vmatprep.subr.bf16.mxu0 0
        %1046 = vmatpush1.bf16.xpose.msra.mxu0 0
        %1047 = vmatprep.subr.bf16.mxu0 0
        %1048 = vmatpush1.bf16.xpose.msra.mxu0 0
        %1049 = vmatprep.subr.bf16.mxu0 0
        %1050 = vmatpush1.bf16.xpose.msra.mxu0 0
        %1051 = vmatprep.mubr.bf16.mxu0 0
        %1052 = vmatmul.mubr.bf16.gmra.mrb[0].mxu0 %v1014
        %v1053 = vpop.f32.mrb[0].mxu0
        %v1054 = vadd.f32 0.0, %v1053
        %v1055 = vpop.f32.mrb[0].mxu0
        %v1056 = vpop.f32.mrb[0].mxu0
        %v1057 = vpop.f32.mrb[0].mxu0
        %1058 = vdwg.mxu0
        %v1059 = vsel %vm828, %v1054, -inf
        %1060 = vmax.xlane.f32.xlu0 %v1059
        %v1061 = vpop.xlane.xlu0 %1060
        %v1062 = vsub.f32 %v1054, %v1061
        %v1063 = vmul.f32 %v1062, 1.442695
        %v1064 = vpow.pop %v1063
        %v1065 = vsel %vm828, %v1064, 0.0
        %1066 = vadd.xlane.f32.xlu0 %v1065
        %v1067 = vpop.xlane.xlu0 %1066
        %v1068 = vrcp.pop %v1067
        %v1069 = vmul.f32 %v1064, %v1068
        %v1070 = vpack.c.bf16 %v1069, %v1069
        %1071 = vrot.lane.b32.xlu0 %v780, 112
        %v1072 = vpop.permute.xlu0 %1071
        %v1075 = vsel %vm828, %v1070, 0
        %1077 = vmatprep.subr.bf16.mxu0 0
        %1078 = vmatpush1.bf16.msra.mxu0 %v1072
        %1079 = vmatprep.subr.bf16.mxu0 0
        %1080 = vmatpush1.bf16.msra.mxu0 0
        %1081 = vmatprep.subr.bf16.mxu0 0
        %1082 = vmatpush1.bf16.msra.mxu0 0
        %1083 = vmatprep.subr.bf16.mxu0 0
        %1084 = vmatpush1.bf16.msra.mxu0 0
        %1085 = vmatprep.subr.bf16.mxu0 0
        %1086 = vmatpush1.bf16.msra.mxu0 0
        %1087 = vmatprep.subr.bf16.mxu0 0
        %1088 = vmatpush1.bf16.msra.mxu0 0
        %1089 = vmatprep.subr.bf16.mxu0 0
        %1090 = vmatpush1.bf16.msra.mxu0 0
        %1091 = vmatprep.subr.bf16.mxu0 0
        %1092 = vmatpush1.bf16.msra.mxu0 0
        %1093 = vmatprep.subr.bf16.mxu0 0
        %1094 = vmatpush1.bf16.msra.mxu0 0
        %1095 = vmatprep.subr.bf16.mxu0 0
        %1096 = vmatpush1.bf16.msra.mxu0 0
        %1097 = vmatprep.subr.bf16.mxu0 0
        %1098 = vmatpush1.bf16.msra.mxu0 0
        %1099 = vmatprep.subr.bf16.mxu0 0
        %1100 = vmatpush1.bf16.msra.mxu0 0
        %1101 = vmatprep.subr.bf16.mxu0 0
        %1102 = vmatpush1.bf16.msra.mxu0 0
        %1103 = vmatprep.subr.bf16.mxu0 0
        %1104 = vmatpush1.bf16.msra.mxu0 0
        %1105 = vmatprep.subr.bf16.mxu0 0
        %1106 = vmatpush1.bf16.msra.mxu0 0
        %1107 = vmatprep.subr.bf16.mxu0 0
        %1108 = vmatpush1.bf16.msra.mxu0 0
        %1109 = vmatprep.mubr.bf16.mxu0 0
        %1110 = vmatmul.mubr.bf16.gmra.mrb[0].mxu0 %v1075
        %v1111 = vpop.f32.mrb[0].mxu0
        %v1112 = vadd.f32 0.0, %v1111
        %v1113 = vpop.f32.mrb[0].mxu0
        %v1114 = vpop.f32.mrb[0].mxu0
        %v1115 = vpop.f32.mrb[0].mxu0
        %1116 = vdwg.mxu0
        %v1117 = vpack.c.bf16 %v1112, %v1112
        %v1119 = vunpack.c.l.b16 %v1117
        %v1120 = vpack.c.b16 %v1119, %v1119
        %1121 = vrot.lane.b32.xlu0 %v1120, 16
        %v1122 = vpop.permute.xlu0 %1121
        %vm1124 = vcmask 191616
        %1125 = vst.msk [vmem:[#allocation5] sm:$0xf] %vm1124, %v1122
        %1126 = vrot.lane.b32.xlu0 %v889, 104
        %v1127 = vpop.permute.xlu0 %1126
        %1128 = vrot.lane.b32.xlu0 %v779, 104
        %v1129 = vpop.permute.xlu0 %1128
        %v1131 = vsel %vm781, %v1127, 0
        %v1134 = vsel %vm781, %v1129, 0
        %1136 = vmatprep.subr.bf16.mxu0 0
        %1137 = vmatpush1.bf16.xpose.msra.mxu0 %v1134
        %1138 = vmatprep.subr.bf16.mxu0 0
        %1139 = vmatpush1.bf16.xpose.msra.mxu0 0
        %1140 = vmatprep.subr.bf16.mxu0 0
        %1141 = vmatpush1.bf16.xpose.msra.mxu0 0
        %1142 = vmatprep.subr.bf16.mxu0 0
        %1143 = vmatpush1.bf16.xpose.msra.mxu0 0
        %1144 = vmatprep.subr.bf16.mxu0 0
        %1145 = vmatpush1.bf16.xpose.msra.mxu0 0
        %1146 = vmatprep.subr.bf16.mxu0 0
        %1147 = vmatpush1.bf16.xpose.msra.mxu0 0
        %1148 = vmatprep.subr.bf16.mxu0 0
        %1149 = vmatpush1.bf16.xpose.msra.mxu0 0
        %1150 = vmatprep.subr.bf16.mxu0 0
        %1151 = vmatpush1.bf16.xpose.msra.mxu0 0
        %1152 = vmatprep.subr.bf16.mxu0 0
        %1153 = vmatpush1.bf16.xpose.msra.mxu0 0
        %1154 = vmatprep.subr.bf16.mxu0 0
        %1155 = vmatpush1.bf16.xpose.msra.mxu0 0
        %1156 = vmatprep.subr.bf16.mxu0 0
        %1157 = vmatpush1.bf16.xpose.msra.mxu0 0
        %1158 = vmatprep.subr.bf16.mxu0 0
        %1159 = vmatpush1.bf16.xpose.msra.mxu0 0
        %1160 = vmatprep.subr.bf16.mxu0 0
        %1161 = vmatpush1.bf16.xpose.msra.mxu0 0
        %1162 = vmatprep.subr.bf16.mxu0 0
        %1163 = vmatpush1.bf16.xpose.msra.mxu0 0
        %1164 = vmatprep.subr.bf16.mxu0 0
        %1165 = vmatpush1.bf16.xpose.msra.mxu0 0
        %1166 = vmatprep.subr.bf16.mxu0 0
        %1167 = vmatpush1.bf16.xpose.msra.mxu0 0
        %1168 = vmatprep.mubr.bf16.mxu0 0
        %1169 = vmatmul.mubr.bf16.gmra.mrb[0].mxu0 %v1131
        %v1170 = vpop.f32.mrb[0].mxu0
        %v1171 = vadd.f32 0.0, %v1170
        %v1172 = vpop.f32.mrb[0].mxu0
        %v1173 = vpop.f32.mrb[0].mxu0
        %v1174 = vpop.f32.mrb[0].mxu0
        %1175 = vdwg.mxu0
        %v1176 = vsel %vm828, %v1171, -inf
        %1177 = vmax.xlane.f32.xlu0 %v1176
        %v1178 = vpop.xlane.xlu0 %1177
        %v1179 = vsub.f32 %v1171, %v1178
        %v1180 = vmul.f32 %v1179, 1.442695
        %v1181 = vpow.pop %v1180
        %v1182 = vsel %vm828, %v1181, 0.0
        %1183 = vadd.xlane.f32.xlu0 %v1182
        %v1184 = vpop.xlane.xlu0 %1183
        %v1185 = vrcp.pop %v1184
        %v1186 = vmul.f32 %v1181, %v1185
        %v1187 = vpack.c.bf16 %v1186, %v1186
        %1188 = vrot.lane.b32.xlu0 %v780, 104
        %v1189 = vpop.permute.xlu0 %1188
        %v1192 = vsel %vm828, %v1187, 0
        %1194 = vmatprep.subr.bf16.mxu0 0
        %1195 = vmatpush1.bf16.msra.mxu0 %v1189
        %1196 = vmatprep.subr.bf16.mxu0 0
        %1197 = vmatpush1.bf16.msra.mxu0 0
        %1198 = vmatprep.subr.bf16.mxu0 0
        %1199 = vmatpush1.bf16.msra.mxu0 0
        %1200 = vmatprep.subr.bf16.mxu0 0
        %1201 = vmatpush1.bf16.msra.mxu0 0
        %1202 = vmatprep.subr.bf16.mxu0 0
        %1203 = vmatpush1.bf16.msra.mxu0 0
        %1204 = vmatprep.subr.bf16.mxu0 0
        %1205 = vmatpush1.bf16.msra.mxu0 0
        %1206 = vmatprep.subr.bf16.mxu0 0
        %1207 = vmatpush1.bf16.msra.mxu0 0
        %1208 = vmatprep.subr.bf16.mxu0 0
        %1209 = vmatpush1.bf16.msra.mxu0 0
        %1210 = vmatprep.subr.bf16.mxu0 0
        %1211 = vmatpush1.bf16.msra.mxu0 0
        %1212 = vmatprep.subr.bf16.mxu0 0
        %1213 = vmatpush1.bf16.msra.mxu0 0
        %1214 = vmatprep.subr.bf16.mxu0 0
        %1215 = vmatpush1.bf16.msra.mxu0 0
        %1216 = vmatprep.subr.bf16.mxu0 0
        %1217 = vmatpush1.bf16.msra.mxu0 0
        %1218 = vmatprep.subr.bf16.mxu0 0
        %1219 = vmatpush1.bf16.msra.mxu0 0
        %1220 = vmatprep.subr.bf16.mxu0 0
        %1221 = vmatpush1.bf16.msra.mxu0 0
        %1222 = vmatprep.subr.bf16.mxu0 0
        %1223 = vmatpush1.bf16.msra.mxu0 0
        %1224 = vmatprep.subr.bf16.mxu0 0
        %1225 = vmatpush1.bf16.msra.mxu0 0
        %1226 = vmatprep.mubr.bf16.mxu0 0
        %1227 = vmatmul.mubr.bf16.gmra.mrb[0].mxu0 %v1192
        %v1228 = vpop.f32.mrb[0].mxu0
        %v1229 = vadd.f32 0.0, %v1228
        %v1230 = vpop.f32.mrb[0].mxu0
        %v1231 = vpop.f32.mrb[0].mxu0
        %v1232 = vpop.f32.mrb[0].mxu0
        %1233 = vdwg.mxu0
        %v1234 = vpack.c.bf16 %v1229, %v1229
        %v1236 = vunpack.c.l.b16 %v1234
        %v1237 = vpack.c.b16 %v1236, %v1236
        %1238 = vrot.lane.b32.xlu0 %v1237, 24
        %v1239 = vpop.permute.xlu0 %1238
        %vm1241 = vcmask 257216
        %1242 = vst.msk [vmem:[#allocation5] sm:$0xf] %vm1241, %v1239
        %v1243 = vld [vmem:[#allocation5] sm:$0xf]
        %v1244 = vld [vmem:[#allocation6] sm:$0xf]
        %v1245 = vld [vmem:[#allocation6 + $0x4] sm:$0xf]
        %v1246 = vld [vmem:[#allocation6 + $0x8] sm:$0xf]
        %v1247 = vld [vmem:[#allocation6 + $0xc] sm:$0xf]
        %v1248 = vld [vmem:[#allocation9] sm:$0x1]
        %v1250 = vlaneseq
        %v1251 = vshrl.u32 %v1250, 7
        %v1252 = vsub.s32 0, %v1251
        %v1253 = vrot.slane %v1248, %v1252
        %v1259 = vunpack.c.l.b16 %v1244
        %v1260 = vunpack.c.l.b16 %v1245
        %v1261 = vunpack.c.l.b16 %v1246
        %v1262 = vunpack.c.l.b16 %v1247
        %v1263 = vpack.c.b16 %v1260, %v1259
        %v1264 = vpack.c.b16 %v1262, %v1261
        %vm1267 = vcmask 261120
        %v1269 = vsel %vm1267, %v1243, 0
        %1271 = vmatprep.subr.bf16.mxu0 0
        %1272 = vmatpush1.bf16.msra.mxu0 %v1263
        %1273 = vmatprep.subr.bf16.mxu0 0
        %1274 = vmatpush1.bf16.msra.mxu0 %v1264
        %1275 = vmatprep.subr.bf16.mxu0 0
        %1276 = vmatpush1.bf16.msra.mxu0 0
        %1277 = vmatprep.subr.bf16.mxu0 0
        %1278 = vmatpush1.bf16.msra.mxu0 0
        %1279 = vmatprep.subr.bf16.mxu0 0
        %1280 = vmatpush1.bf16.msra.mxu0 0
        %1281 = vmatprep.subr.bf16.mxu0 0
        %1282 = vmatpush1.bf16.msra.mxu0 0
        %1283 = vmatprep.subr.bf16.mxu0 0
        %1284 = vmatpush1.bf16.msra.mxu0 0
        %1285 = vmatprep.subr.bf16.mxu0 0
        %1286 = vmatpush1.bf16.msra.mxu0 0
        %1287 = vmatprep.subr.bf16.mxu0 0
        %1288 = vmatpush1.bf16.msra.mxu0 0
        %1289 = vmatprep.subr.bf16.mxu0 0
        %1290 = vmatpush1.bf16.msra.mxu0 0
        %1291 = vmatprep.subr.bf16.mxu0 0
        %1292 = vmatpush1.bf16.msra.mxu0 0
        %1293 = vmatprep.subr.bf16.mxu0 0
        %1294 = vmatpush1.bf16.msra.mxu0 0
        %1295 = vmatprep.subr.bf16.mxu0 0
        %1296 = vmatpush1.bf16.msra.mxu0 0
        %1297 = vmatprep.subr.bf16.mxu0 0
        %1298 = vmatpush1.bf16.msra.mxu0 0
        %1299 = vmatprep.subr.bf16.mxu0 0
        %1300 = vmatpush1.bf16.msra.mxu0 0
        %1301 = vmatprep.subr.bf16.mxu0 0
        %1302 = vmatpush1.bf16.msra.mxu0 0
        %1303 = vmatprep.mubr.bf16.mxu0 0
        %1304 = vmatmul.mubr.bf16.gmra.mrb[0].mxu0 %v1269
        %v1305 = vpop.f32.mrb[0].mxu0
        %v1306 = vadd.f32 %v1253, %v1305
        %v1307 = vpop.f32.mrb[0].mxu0
        %v1308 = vpop.f32.mrb[0].mxu0
        %v1309 = vpop.f32.mrb[0].mxu0
        %1310 = vdwg.mxu0
        %v1311 = vadd.f32 %v775, %v1306
        %v1312 = vld [vmem:[#allocation11] sm:$0x1]
        %v1313 = vld [vmem:[#allocation12] sm:$0x1]
        %v1314 = vsel %vm1267, %v1311, 0.0
        %1315 = vadd.xlane.f32.xlu0 %v1314
        %v1316 = vpop.xlane.xlu0 %1315
        %v1317 = vrcp.pop 32.0
        %v1318 = vmul.f32 %v1316, %v1317
        %v1319 = vsub.f32 %v1311, %v1318
        %v1320 = vmul.f32 %v1319, %v1319
        %v1321 = vsel %vm1267, %v1320, 0.0
        %1322 = vadd.xlane.f32.xlu0 %v1321
        %v1323 = vpop.xlane.xlu0 %1322
        %v1324 = vmul.f32 %v1323, %v1317
        %v1325 = vadd.f32 %v1324, 1e-05
        %v1326 = vrsqrt.pop %v1325
        %v1327 = vmul.f32 %v1319, %v1326
        %v1329 = vlaneseq
        %v1330 = vshrl.u32 %v1329, 7
        %v1331 = vsub.s32 0, %v1330
        %v1332 = vrot.slane %v1312, %v1331
        %v1334 = vmul.f32 %v1327, %v1332
        %v1336 = vlaneseq
        %v1337 = vshrl.u32 %v1336, 7
        %v1338 = vsub.s32 0, %v1337
        %v1339 = vrot.slane %v1313, %v1338
        %v1341 = vadd.f32 %v1334, %v1339
        %v1342 = vpack.c.bf16 %v1341, %v1341
        %v1343 = vld [vmem:[%s10] sm:$0xf]
        %v1344 = vld [vmem:[%s10 + $0x4] sm:$0xf]
        %v1345 = vld [vmem:[%s10 + $0x8] sm:$0xf]
        %v1346 = vld [vmem:[%s10 + $0xc] sm:$0xf]
        %v1347 = vld [vmem:[%s11] sm:$0x1]
        %v1349 = vlaneseq
        %v1350 = vshrl.u32 %v1349, 7
        %v1351 = vsub.s32 0, %v1350
        %v1352 = vrot.slane %v1347, %v1351
        %v1358 = vunpack.c.l.b16 %v1343
        %v1359 = vunpack.c.l.b16 %v1344
        %v1360 = vunpack.c.l.b16 %v1345
        %v1361 = vunpack.c.l.b16 %v1346
        %v1362 = vpack.c.b16 %v1359, %v1358
        %v1363 = vpack.c.b16 %v1361, %v1360
        %v1367 = vsel %vm1267, %v1342, 0
        %1369 = vmatprep.subr.bf16.mxu0 0
        %1370 = vmatpush1.bf16.msra.mxu0 %v1362
        %1371 = vmatprep.subr.bf16.mxu0 0
        %1372 = vmatpush1.bf16.msra.mxu0 %v1363
        %1373 = vmatprep.subr.bf16.mxu0 0
        %1374 = vmatpush1.bf16.msra.mxu0 0
        %1375 = vmatprep.subr.bf16.mxu0 0
        %1376 = vmatpush1.bf16.msra.mxu0 0
        %1377 = vmatprep.subr.bf16.mxu0 0
        %1378 = vmatpush1.bf16.msra.mxu0 0
        %1379 = vmatprep.subr.bf16.mxu0 0
        %1380 = vmatpush1.bf16.msra.mxu0 0
        %1381 = vmatprep.subr.bf16.mxu0 0
        %1382 = vmatpush1.bf16.msra.mxu0 0
        %1383 = vmatprep.subr.bf16.mxu0 0
        %1384 = vmatpush1.bf16.msra.mxu0 0
        %1385 = vmatprep.subr.bf16.mxu0 0
        %1386 = vmatpush1.bf16.msra.mxu0 0
        %1387 = vmatprep.subr.bf16.mxu0 0
        %1388 = vmatpush1.bf16.msra.mxu0 0
        %1389 = vmatprep.subr.bf16.mxu0 0
        %1390 = vmatpush1.bf16.msra.mxu0 0
        %1391 = vmatprep.subr.bf16.mxu0 0
        %1392 = vmatpush1.bf16.msra.mxu0 0
        %1393 = vmatprep.subr.bf16.mxu0 0
        %1394 = vmatpush1.bf16.msra.mxu0 0
        %1395 = vmatprep.subr.bf16.mxu0 0
        %1396 = vmatpush1.bf16.msra.mxu0 0
        %1397 = vmatprep.subr.bf16.mxu0 0
        %1398 = vmatpush1.bf16.msra.mxu0 0
        %1399 = vmatprep.subr.bf16.mxu0 0
        %1400 = vmatpush1.bf16.msra.mxu0 0
        %1401 = vmatprep.mubr.bf16.mxu0 0
        %1402 = vmatmul.mubr.bf16.gmra.mrb[0].mxu0 %v1367
        %v1403 = vpop.f32.mrb[0].mxu0
        %v1404 = vadd.f32 %v1352, %v1403
        %v1405 = vpop.f32.mrb[0].mxu0
        %v1406 = vpop.f32.mrb[0].mxu0
        %v1407 = vpop.f32.mrb[0].mxu0
        %1408 = vdwg.mxu0
        %v1409 = vmul.f32 %v1404, 0.5
        %v1410 = vmul.f32 %v1404, 0.70710677
        %v1411 = verf.f32.pop %v1410
        %v1412 = vadd.f32 %v1411, 1.0
        %v1413 = vmul.f32 %v1409, %v1412
        %v1414 = vpack.c.bf16 %v1413, %v1413
        %v1415 = vld [vmem:[%s12] sm:$0xf]
        %v1416 = vld [vmem:[%s12 + $0x4] sm:$0xf]
        %v1417 = vld [vmem:[%s12 + $0x8] sm:$0xf]
        %v1418 = vld [vmem:[%s12 + $0xc] sm:$0xf]
        %v1419 = vld [vmem:[%s12 + $0x10] sm:$0xf]
        %v1420 = vld [vmem:[%s12 + $0x14] sm:$0xf]
        %v1421 = vld [vmem:[%s12 + $0x18] sm:$0xf]
        %v1422 = vld [vmem:[%s12 + $0x1c] sm:$0xf]
        %v1423 = vld [vmem:[%s12 + $0x20] sm:$0xf]
        %v1424 = vld [vmem:[%s12 + $0x24] sm:$0xf]
        %v1425 = vld [vmem:[%s12 + $0x28] sm:$0xf]
        %v1426 = vld [vmem:[%s12 + $0x2c] sm:$0xf]
        %v1427 = vld [vmem:[%s12 + $0x30] sm:$0xf]
        %v1428 = vld [vmem:[%s12 + $0x34] sm:$0xf]
        %v1429 = vld [vmem:[%s12 + $0x38] sm:$0xf]
        %v1430 = vld [vmem:[%s12 + $0x3c] sm:$0xf]
        %v1431 = vld [vmem:[%s13] sm:$0x1]
        %v1433 = vlaneseq
        %v1434 = vshrl.u32 %v1433, 7
        %v1435 = vsub.s32 0, %v1434
        %v1436 = vrot.slane %v1431, %v1435
        %v1454 = vunpack.c.l.b16 %v1415
        %v1455 = vunpack.c.l.b16 %v1416
        %v1456 = vunpack.c.l.b16 %v1417
        %v1457 = vunpack.c.l.b16 %v1418
        %v1458 = vunpack.c.l.b16 %v1419
        %v1459 = vunpack.c.l.b16 %v1420
        %v1460 = vunpack.c.l.b16 %v1421
        %v1461 = vunpack.c.l.b16 %v1422
        %v1462 = vunpack.c.l.b16 %v1423
        %v1463 = vunpack.c.l.b16 %v1424
        %v1464 = vunpack.c.l.b16 %v1425
        %v1465 = vunpack.c.l.b16 %v1426
        %v1466 = vunpack.c.l.b16 %v1427
        %v1467 = vunpack.c.l.b16 %v1428
        %v1468 = vunpack.c.l.b16 %v1429
        %v1469 = vunpack.c.l.b16 %v1430
        %v1470 = vpack.c.b16 %v1455, %v1454
        %v1471 = vpack.c.b16 %v1457, %v1456
        %v1472 = vpack.c.b16 %v1459, %v1458
        %v1473 = vpack.c.b16 %v1461, %v1460
        %v1474 = vpack.c.b16 %v1463, %v1462
        %v1475 = vpack.c.b16 %v1465, %v1464
        %v1476 = vpack.c.b16 %v1467, %v1466
        %v1477 = vpack.c.b16 %v1469, %v1468
        %1486 = vmatprep.subr.bf16.mxu0 0
        %1487 = vmatpush1.bf16.msra.mxu0 %v1470
        %1488 = vmatprep.subr.bf16.mxu0 0
        %1489 = vmatpush1.bf16.msra.mxu0 %v1471
        %1490 = vmatprep.subr.bf16.mxu0 0
        %1491 = vmatpush1.bf16.msra.mxu0 %v1472
        %1492 = vmatprep.subr.bf16.mxu0 0
        %1493 = vmatpush1.bf16.msra.mxu0 %v1473
        %1494 = vmatprep.subr.bf16.mxu0 0
        %1495 = vmatpush1.bf16.msra.mxu0 %v1474
        %1496 = vmatprep.subr.bf16.mxu0 0
        %1497 = vmatpush1.bf16.msra.mxu0 %v1475
        %1498 = vmatprep.subr.bf16.mxu0 0
        %1499 = vmatpush1.bf16.msra.mxu0 %v1476
        %1500 = vmatprep.subr.bf16.mxu0 0
        %1501 = vmatpush1.bf16.msra.mxu0 %v1477
        %1502 = vmatprep.subr.bf16.mxu0 0
        %1503 = vmatpush1.bf16.msra.mxu0 0
        %1504 = vmatprep.subr.bf16.mxu0 0
        %1505 = vmatpush1.bf16.msra.mxu0 0
        %1506 = vmatprep.subr.bf16.mxu0 0
        %1507 = vmatpush1.bf16.msra.mxu0 0
        %1508 = vmatprep.subr.bf16.mxu0 0
        %1509 = vmatpush1.bf16.msra.mxu0 0
        %1510 = vmatprep.subr.bf16.mxu0 0
        %1511 = vmatpush1.bf16.msra.mxu0 0
        %1512 = vmatprep.subr.bf16.mxu0 0
        %1513 = vmatpush1.bf16.msra.mxu0 0
        %1514 = vmatprep.subr.bf16.mxu0 0
        %1515 = vmatpush1.bf16.msra.mxu0 0
        %1516 = vmatprep.subr.bf16.mxu0 0
        %1517 = vmatpush1.bf16.msra.mxu0 0
        %1518 = vmatprep.mubr.bf16.mxu0 0
        %1519 = vmatmul.mubr.bf16.gmra.mrb[0].mxu0 %v1414
        %v1520 = vpop.f32.mrb[0].mxu0
        %v1521 = vadd.f32 %v1436, %v1520
        %v1522 = vpop.f32.mrb[0].mxu0
        %v1523 = vpop.f32.mrb[0].mxu0
        %v1524 = vpop.f32.mrb[0].mxu0
        %1525 = vdwg.mxu0
        %v1526 = vadd.f32 %v1311, %v1521
        %1527 = vst.msk [vmem:[%s527] sm:$0xff] %vm1267, %v1526
        %s1528 = sand.u32 %s352, 1
        %s1529 = scalar_lea.sflag [#allocation8], %s1528
        %s1530 = sand.u32 %s352, 1
        %s1531 = smul.addr %s1530, 8
        %s1532 = scalar_lea.vmem [#allocation14], %s1531
        // Predicated region
        $region97: #{tpu_custom_call.1} parent=75 // pred_check
          %p1533 = pneg %p362
        $region98: #{tpu_custom_call.1} parent=75 // pred_check_branch
          %1535 = sbr.rel (%p1533) target = $region100
        $region99: #{tpu_custom_call.1} parent=75 // pred_region
          %s1537 = ssub.s32 128, 128
          %1538 = vsyncadd %s1529, %s1537
          %s1539 = smul.addr %s35, 2
          %s1540 = sadd.s32 %s36, %s1539
          %s1541 = smul.addr %s1540, 128
          %s1542 = scalar_lea.hbm %s14, %s1541
          %s1544 = sshll.u32 %s1532, 4
          %s1545 = int_to_ptr.vmem [resolvable:$true] %s1544
          %1547 = dma.vmem_to_hbm [thread:$0]  %s1545, 128, %s1542, %s1529
        $region100: #{tpu_custom_call.1} parent=75 // pred_fallthru
          _
      $region76: #{tpu_custom_call.1} parent=5 // pred_fallthru
        _
      %p1548 = scmp.le.s32.totalorder 2, %s26
      // Predicated region
      $region101: #{tpu_custom_call.1} parent=5 // pred_check
        %p1549 = pneg %p1548
      $region102: #{tpu_custom_call.1} parent=5 // pred_check_branch
        %1551 = sbr.rel (%p1549) target = $region104
      $region103: #{tpu_custom_call.1} parent=5 // pred_region
        %s1552 = ssub.s32 %s26, 2
        // Predicated region
        $region105: #{tpu_custom_call.1} parent=103 // pred_check
          %p1553 = pneg %p368
        $region106: #{tpu_custom_call.1} parent=103 // pred_check_branch
          %1555 = sbr.rel (%p1553) target = $region108
        $region107: #{tpu_custom_call.1} parent=103 // pred_region
          %s1556 = sand.u32 %s353, 1
          %s1557 = scalar_lea.sflag [#allocation8], %s1556
          %s1558 = sand.u32 %s353, 1
          %s1559 = smul.addr %s1558, 8
          %s1560 = scalar_lea.vmem [#allocation14], %s1559
          %1561 = dma.done %s1557, 128
        $region108: #{tpu_custom_call.1} parent=103 // pred_fallthru
          _
      $region104: #{tpu_custom_call.1} parent=5 // pred_fallthru
        _
    $region6: #{tpu_custom_call.1} parent=1 // loop_footer
      %s30 = sadd.s32 1, %s26
    $region7: #{tpu_custom_call.1} parent=1 // loop_footer_branch
      %25 = sbr.rel target = $region3
    $region8: #{tpu_custom_call.1} parent=1 // loop_exit
      _
    %1562 = vsyncpa [#allocation7], 1
    %s1563 = scalar_lea.sflag [#allocation7], 1
    %1564 = vsyncpa %s1563, 1
    %1565 = vsyncpa [#allocation10], 1
    %1566 = vsyncpa [#allocation13], 1
    %1567 = vsyncpa [#allocation8], 1
    %s1568 = scalar_lea.sflag [#allocation8], 1
    %1569 = vsyncpa %s1568, 1

</llo_original>
